<compile_context>
chip_gen: v7x
topology: tpu7x:2x2x1
jax: 0.10.0
libtpu: 0.0.40
codegen_flags: <defaults>
</compile_context>

<pallas_src>
import functools

import jax
import jax.numpy as jnp
from jax.experimental import pallas as pl
from jax.experimental.pallas import tpu as pltpu

WIDTH = 128
IN_FEATURES = 28 * 28            # 784 (multiple of 8; block last dim == full dim)
OUT_FEATURES = 10
OUT_FEATURES_PADDED = 128        # lane-dense output; sliced to 10 in the wrapper
N_HIDDEN = 7                     # 128x128 hidden Linear layers after the first


def _round_up(x, m):
    return (x + m - 1) // m * m


def mlp_kernel(x_ref, *refs, approximate_gelu=True):
    """refs = (w0, b0, w1, b1, ..., w8, b8, out_ref).

    All 9 matmuls (bf16 operands, f32 MXU accumulation) and the 8 GELUs for one
    batch tile are fused here; the layer loop unrolls at trace time.
    Activations are kept bf16 between layers; GELU math runs in f32.
    """
    params = refs[:-1]
    out_ref = refs[-1]
    n_layers = len(params) // 2

    h = x_ref[...].astype(jnp.bfloat16)                    # (tile, 784) bf16
    for i in range(n_layers):
        w = params[2 * i][...]                             # (in, out) bf16
        b = params[2 * i + 1][...]                         # (1, out)  f32, broadcasts
        acc = jnp.dot(h, w, preferred_element_type=jnp.float32) + b
        if i < n_layers - 1:
            # tanh-approx GELU -> EUP slot; erf (exact) would run on the VALU.
            h = jax.nn.gelu(acc, approximate=approximate_gelu).astype(jnp.bfloat16)
        else:
            out_ref[...] = acc.astype(out_ref.dtype)


def init_params(key, weight_dtype=jnp.bfloat16):
    """PyTorch nn.Linear-style init (uniform +-1/sqrt(fan_in)).

    Weights are stored (in, out) so the kernel computes x @ W directly.  The
    last layer is zero-padded on its output axis 10 -> 128 so the kernel's
    store is a lane-dense, unmasked 128-wide vst (padded columns stay inert).
    """
    dims = ([(IN_FEATURES, WIDTH)]
            + [(WIDTH, WIDTH)] * N_HIDDEN
            + [(WIDTH, OUT_FEATURES)])
    params = []
    for fan_in, fan_out in dims:
        key, kw, kb = jax.random.split(key, 3)
        bound = float(fan_in) ** -0.5
        w = jax.random.uniform(kw, (fan_in, fan_out), jnp.float32, -bound, bound)
        b = jax.random.uniform(kb, (1, fan_out), jnp.float32, -bound, bound)
        if fan_out == OUT_FEATURES:                        # last layer: pad 10 -> 128
            pad = OUT_FEATURES_PADDED - OUT_FEATURES
            w = jnp.pad(w, ((0, 0), (0, pad)))
            b = jnp.pad(b, ((0, 0), (0, pad)))
        params.append(w.astype(weight_dtype))              # bf16 weights
        params.append(b)                                   # f32 biases
    return params


@functools.partial(jax.jit, static_argnames=("batch_tile", "approximate_gelu"))
def simple_mlp_gelu(x_nchw, params, batch_tile=512, approximate_gelu=True):
    """Forward pass of SimpleMLP_GELU. x_nchw: (B, 1, 28, 28) float32."""
    B = x_nchw.shape[0]
    x = x_nchw.reshape(B, -1)                              # nn.Flatten -> (B, 784), no copy
    assert x.shape[1] == IN_FEATURES

    # Batch tile: big enough to feed the MXU M dimension and amortize the
    # ~0.35us/step grid overhead, but capped so the grid has >= 2 tiles
    # whenever B allows it (keeps both v7x TensorCores busy).
    tile = min(batch_tile, max(8, _round_up(pl.cdiv(B, 2), 8)))
    num_tiles = pl.cdiv(B, tile)
    b_pad = num_tiles * tile                               # only the OUTPUT is padded

    # Full-array parameter blocks with constant index_maps: DMA'd once, then
    # held resident (Pallas skips re-fetch when the block index is unchanged).
    param_specs = [pl.BlockSpec(p.shape, lambda i: (0, 0)) for p in params]

    weight_bytes = sum(int(p.size) * p.dtype.itemsize for p in params)
    cost = pl.CostEstimate(
        flops=2 * b_pad * (IN_FEATURES * WIDTH
                           + N_HIDDEN * WIDTH * WIDTH
                           + WIDTH * OUT_FEATURES_PADDED),
        transcendentals=(N_HIDDEN + 1) * b_pad * WIDTH,
        bytes_accessed=(B * IN_FEATURES * 4 + weight_bytes
                        + b_pad * OUT_FEATURES_PADDED * 4),
    )

    out = pl.pallas_call(
        functools.partial(mlp_kernel, approximate_gelu=approximate_gelu),
        out_shape=jax.ShapeDtypeStruct((b_pad, OUT_FEATURES_PADDED), jnp.float32),
        grid_spec=pltpu.PrefetchScalarGridSpec(
            num_scalar_prefetch=0,
            grid=(num_tiles,),
            # x is NOT padded: block last dim == full array dim (784) is legal,
            # and the last partial batch block's stale rows only feed padded
            # output rows, which are sliced off below.
            in_specs=[pl.BlockSpec((tile, IN_FEATURES), lambda i: (i, 0))]
                     + param_specs,
            out_specs=pl.BlockSpec((tile, OUT_FEATURES_PADDED), lambda i: (i, 0)),
        ),
        compiler_params=pltpu.CompilerParams(
            dimension_semantics=("parallel",),             # shards batch tiles across TCs
            vmem_limit_bytes=32 * 1024 * 1024,
        ),
        cost_estimate=cost,
    )(x, *params)
    return out[:B, :OUT_FEATURES]


def reference_forward(x_nchw, params, approximate_gelu=True):
    """Pure-JAX reference mirroring the kernel math exactly
    (bf16 weights/activations, f32 accumulation, same GELU variant)."""
    h = x_nchw.reshape(x_nchw.shape[0], -1).astype(jnp.bfloat16)
    n_layers = len(params) // 2
    for i in range(n_layers):
        w, b = params[2 * i], params[2 * i + 1]
        acc = jnp.dot(h, w, preferred_element_type=jnp.float32) + b
        if i < n_layers - 1:
            h = jax.nn.gelu(acc, approximate=approximate_gelu).astype(jnp.bfloat16)
        else:
            h = acc
    return h[:, :OUT_FEATURES]


if __name__ == "__main__":
    key = jax.random.PRNGKey(0)
    key, kx = jax.random.split(key)

    # Small, deterministic inputs. B=12 is not a multiple of 8 (exercises the
    # partial last batch block) and still yields a 2-tile grid.
    B = 12
    x = jax.random.normal(kx, (B, 1, 28, 28), jnp.float32)   # MNIST-like NCHW
    params = init_params(key)

    out = simple_mlp_gelu(x, params)
    out = jax.block_until_ready(out)

    ref = reference_forward(x, params)
    assert out.shape == (B, OUT_FEATURES), out.shape
    max_diff = jnp.max(jnp.abs(out - ref))
    assert jnp.allclose(out, ref, atol=1e-3, rtol=1e-3), f"max abs diff {max_diff}"

    print("KERNEL_OK")
</pallas_src>

<mosaic_0001>
module attributes {stable_mosaic.version = 11 : i64} {
  func.func @mlp_kernel(%arg0: i32, %arg1: memref<8x784xf32, #tpu.memory_space<vmem>>, %arg2: memref<784x128xbf16, #tpu.memory_space<vmem>>, %arg3: memref<1x128xf32, #tpu.memory_space<vmem>>, %arg4: memref<128x128xbf16, #tpu.memory_space<vmem>>, %arg5: memref<1x128xf32, #tpu.memory_space<vmem>>, %arg6: memref<128x128xbf16, #tpu.memory_space<vmem>>, %arg7: memref<1x128xf32, #tpu.memory_space<vmem>>, %arg8: memref<128x128xbf16, #tpu.memory_space<vmem>>, %arg9: memref<1x128xf32, #tpu.memory_space<vmem>>, %arg10: memref<128x128xbf16, #tpu.memory_space<vmem>>, %arg11: memref<1x128xf32, #tpu.memory_space<vmem>>, %arg12: memref<128x128xbf16, #tpu.memory_space<vmem>>, %arg13: memref<1x128xf32, #tpu.memory_space<vmem>>, %arg14: memref<128x128xbf16, #tpu.memory_space<vmem>>, %arg15: memref<1x128xf32, #tpu.memory_space<vmem>>, %arg16: memref<128x128xbf16, #tpu.memory_space<vmem>>, %arg17: memref<1x128xf32, #tpu.memory_space<vmem>>, %arg18: memref<128x128xbf16, #tpu.memory_space<vmem>>, %arg19: memref<1x128xf32, #tpu.memory_space<vmem>>, %arg20: memref<8x128xf32, #tpu.memory_space<vmem>>) attributes {dimension_semantics = [#tpu.dimension_semantics<parallel>], iteration_bounds = array<i64: 2>, scalar_prefetch = 0 : i64, scratch_operands = 0 : i64, tpu.core_type = #tpu.core_type<tc>, window_params = [{transform_indices = @transform_0, window_bounds = array<i64: 8, 784>}, {pipeline_mode = #tpu.pipeline_mode<synchronous>, transform_indices = @transform_1, window_bounds = array<i64: 784, 128>}, {pipeline_mode = #tpu.pipeline_mode<synchronous>, transform_indices = @transform_2, window_bounds = array<i64: 1, 128>}, {pipeline_mode = #tpu.pipeline_mode<synchronous>, transform_indices = @transform_3, window_bounds = array<i64: 128, 128>}, {pipeline_mode = #tpu.pipeline_mode<synchronous>, transform_indices = @transform_4, window_bounds = array<i64: 1, 128>}, {pipeline_mode = #tpu.pipeline_mode<synchronous>, transform_indices = @transform_5, window_bounds = array<i64: 128, 128>}, {pipeline_mode = #tpu.pipeline_mode<synchronous>, transform_indices = @transform_6, window_bounds = array<i64: 1, 128>}, {pipeline_mode = #tpu.pipeline_mode<synchronous>, transform_indices = @transform_7, window_bounds = array<i64: 128, 128>}, {pipeline_mode = #tpu.pipeline_mode<synchronous>, transform_indices = @transform_8, window_bounds = array<i64: 1, 128>}, {pipeline_mode = #tpu.pipeline_mode<synchronous>, transform_indices = @transform_9, window_bounds = array<i64: 128, 128>}, {pipeline_mode = #tpu.pipeline_mode<synchronous>, transform_indices = @transform_10, window_bounds = array<i64: 1, 128>}, {pipeline_mode = #tpu.pipeline_mode<synchronous>, transform_indices = @transform_11, window_bounds = array<i64: 128, 128>}, {pipeline_mode = #tpu.pipeline_mode<synchronous>, transform_indices = @transform_12, window_bounds = array<i64: 1, 128>}, {pipeline_mode = #tpu.pipeline_mode<synchronous>, transform_indices = @transform_13, window_bounds = array<i64: 128, 128>}, {pipeline_mode = #tpu.pipeline_mode<synchronous>, transform_indices = @transform_14, window_bounds = array<i64: 1, 128>}, {pipeline_mode = #tpu.pipeline_mode<synchronous>, transform_indices = @transform_15, window_bounds = array<i64: 128, 128>}, {pipeline_mode = #tpu.pipeline_mode<synchronous>, transform_indices = @transform_16, window_bounds = array<i64: 1, 128>}, {pipeline_mode = #tpu.pipeline_mode<synchronous>, transform_indices = @transform_17, window_bounds = array<i64: 128, 128>}, {pipeline_mode = #tpu.pipeline_mode<synchronous>, transform_indices = @transform_18, window_bounds = array<i64: 1, 128>}, {transform_indices = @transform_19, window_bounds = array<i64: 8, 128>}]} {
    %c0 = arith.constant 0 : index
    %c0_0 = arith.constant 0 : index
    %0 = vector.load %arg1[%c0, %c0_0] : memref<8x784xf32, #tpu.memory_space<vmem>>, vector<8x784xf32>
    %1 = arith.truncf %0 : vector<8x784xf32> to vector<8x784xbf16>
    %c0_1 = arith.constant 0 : index
    %c0_2 = arith.constant 0 : index
    %2 = vector.load %arg2[%c0_1, %c0_2] : memref<784x128xbf16, #tpu.memory_space<vmem>>, vector<784x128xbf16>
    %c0_3 = arith.constant 0 : index
    %c0_4 = arith.constant 0 : index
    %3 = vector.load %arg3[%c0_3, %c0_4] : memref<1x128xf32, #tpu.memory_space<vmem>>, vector<1x128xf32>
    %cst = arith.constant dense<0.000000e+00> : vector<8x128xf32>
    %4 = tpu.matmul %1, %2, %cst {dimension_numbers = #tpu.dot_dimension_numbers<[1], [0], [0], [1], [0, 0, 1, 1], [], []>} : vector<8x784xbf16>, vector<784x128xbf16>, vector<8x128xf32> -> vector<8x128xf32>
    %5 = vector.broadcast %3 : vector<1x128xf32> to vector<8x128xf32>
    %6 = arith.addf %4, %5 : vector<8x128xf32>
    %7 = arith.mulf %6, %6 : vector<8x128xf32>
    %8 = arith.mulf %6, %7 : vector<8x128xf32>
    %cst_5 = arith.constant 4.471500e-02 : f32
    %9 = vector.broadcast %cst_5 : f32 to vector<8x128xf32>
    %10 = arith.mulf %9, %8 : vector<8x128xf32>
    %11 = arith.addf %6, %10 : vector<8x128xf32>
    %cst_6 = arith.constant 0.797884583 : f32
    %12 = vector.broadcast %cst_6 : f32 to vector<8x128xf32>
    %13 = arith.mulf %12, %11 : vector<8x128xf32>
    %14 = math.tanh %13 : vector<8x128xf32>
    %cst_7 = arith.constant 1.000000e+00 : f32
    %15 = vector.broadcast %cst_7 : f32 to vector<8x128xf32>
    %16 = arith.addf %15, %14 : vector<8x128xf32>
    %cst_8 = arith.constant 5.000000e-01 : f32
    %17 = vector.broadcast %cst_8 : f32 to vector<8x128xf32>
    %18 = arith.mulf %17, %16 : vector<8x128xf32>
    %19 = arith.mulf %6, %18 : vector<8x128xf32>
    %20 = arith.truncf %19 : vector<8x128xf32> to vector<8x128xbf16>
    %c0_9 = arith.constant 0 : index
    %c0_10 = arith.constant 0 : index
    %21 = vector.load %arg4[%c0_9, %c0_10] : memref<128x128xbf16, #tpu.memory_space<vmem>>, vector<128x128xbf16>
    %c0_11 = arith.constant 0 : index
    %c0_12 = arith.constant 0 : index
    %22 = vector.load %arg5[%c0_11, %c0_12] : memref<1x128xf32, #tpu.memory_space<vmem>>, vector<1x128xf32>
    %cst_13 = arith.constant dense<0.000000e+00> : vector<8x128xf32>
    %23 = tpu.matmul %20, %21, %cst_13 {dimension_numbers = #tpu.dot_dimension_numbers<[1], [0], [0], [1], [0, 0, 1, 1], [], []>} : vector<8x128xbf16>, vector<128x128xbf16>, vector<8x128xf32> -> vector<8x128xf32>
    %24 = vector.broadcast %22 : vector<1x128xf32> to vector<8x128xf32>
    %25 = arith.addf %23, %24 : vector<8x128xf32>
    %26 = arith.mulf %25, %25 : vector<8x128xf32>
    %27 = arith.mulf %25, %26 : vector<8x128xf32>
    %cst_14 = arith.constant 4.471500e-02 : f32
    %28 = vector.broadcast %cst_14 : f32 to vector<8x128xf32>
    %29 = arith.mulf %28, %27 : vector<8x128xf32>
    %30 = arith.addf %25, %29 : vector<8x128xf32>
    %cst_15 = arith.constant 0.797884583 : f32
    %31 = vector.broadcast %cst_15 : f32 to vector<8x128xf32>
    %32 = arith.mulf %31, %30 : vector<8x128xf32>
    %33 = math.tanh %32 : vector<8x128xf32>
    %cst_16 = arith.constant 1.000000e+00 : f32
    %34 = vector.broadcast %cst_16 : f32 to vector<8x128xf32>
    %35 = arith.addf %34, %33 : vector<8x128xf32>
    %cst_17 = arith.constant 5.000000e-01 : f32
    %36 = vector.broadcast %cst_17 : f32 to vector<8x128xf32>
    %37 = arith.mulf %36, %35 : vector<8x128xf32>
    %38 = arith.mulf %25, %37 : vector<8x128xf32>
    %39 = arith.truncf %38 : vector<8x128xf32> to vector<8x128xbf16>
    %c0_18 = arith.constant 0 : index
    %c0_19 = arith.constant 0 : index
    %40 = vector.load %arg6[%c0_18, %c0_19] : memref<128x128xbf16, #tpu.memory_space<vmem>>, vector<128x128xbf16>
    %c0_20 = arith.constant 0 : index
    %c0_21 = arith.constant 0 : index
    %41 = vector.load %arg7[%c0_20, %c0_21] : memref<1x128xf32, #tpu.memory_space<vmem>>, vector<1x128xf32>
    %cst_22 = arith.constant dense<0.000000e+00> : vector<8x128xf32>
    %42 = tpu.matmul %39, %40, %cst_22 {dimension_numbers = #tpu.dot_dimension_numbers<[1], [0], [0], [1], [0, 0, 1, 1], [], []>} : vector<8x128xbf16>, vector<128x128xbf16>, vector<8x128xf32> -> vector<8x128xf32>
    %43 = vector.broadcast %41 : vector<1x128xf32> to vector<8x128xf32>
    %44 = arith.addf %42, %43 : vector<8x128xf32>
    %45 = arith.mulf %44, %44 : vector<8x128xf32>
    %46 = arith.mulf %44, %45 : vector<8x128xf32>
    %cst_23 = arith.constant 4.471500e-02 : f32
    %47 = vector.broadcast %cst_23 : f32 to vector<8x128xf32>
    %48 = arith.mulf %47, %46 : vector<8x128xf32>
    %49 = arith.addf %44, %48 : vector<8x128xf32>
    %cst_24 = arith.constant 0.797884583 : f32
    %50 = vector.broadcast %cst_24 : f32 to vector<8x128xf32>
    %51 = arith.mulf %50, %49 : vector<8x128xf32>
    %52 = math.tanh %51 : vector<8x128xf32>
    %cst_25 = arith.constant 1.000000e+00 : f32
    %53 = vector.broadcast %cst_25 : f32 to vector<8x128xf32>
    %54 = arith.addf %53, %52 : vector<8x128xf32>
    %cst_26 = arith.constant 5.000000e-01 : f32
    %55 = vector.broadcast %cst_26 : f32 to vector<8x128xf32>
    %56 = arith.mulf %55, %54 : vector<8x128xf32>
    %57 = arith.mulf %44, %56 : vector<8x128xf32>
    %58 = arith.truncf %57 : vector<8x128xf32> to vector<8x128xbf16>
    %c0_27 = arith.constant 0 : index
    %c0_28 = arith.constant 0 : index
    %59 = vector.load %arg8[%c0_27, %c0_28] : memref<128x128xbf16, #tpu.memory_space<vmem>>, vector<128x128xbf16>
    %c0_29 = arith.constant 0 : index
    %c0_30 = arith.constant 0 : index
    %60 = vector.load %arg9[%c0_29, %c0_30] : memref<1x128xf32, #tpu.memory_space<vmem>>, vector<1x128xf32>
    %cst_31 = arith.constant dense<0.000000e+00> : vector<8x128xf32>
    %61 = tpu.matmul %58, %59, %cst_31 {dimension_numbers = #tpu.dot_dimension_numbers<[1], [0], [0], [1], [0, 0, 1, 1], [], []>} : vector<8x128xbf16>, vector<128x128xbf16>, vector<8x128xf32> -> vector<8x128xf32>
    %62 = vector.broadcast %60 : vector<1x128xf32> to vector<8x128xf32>
    %63 = arith.addf %61, %62 : vector<8x128xf32>
    %64 = arith.mulf %63, %63 : vector<8x128xf32>
    %65 = arith.mulf %63, %64 : vector<8x128xf32>
    %cst_32 = arith.constant 4.471500e-02 : f32
    %66 = vector.broadcast %cst_32 : f32 to vector<8x128xf32>
    %67 = arith.mulf %66, %65 : vector<8x128xf32>
    %68 = arith.addf %63, %67 : vector<8x128xf32>
    %cst_33 = arith.constant 0.797884583 : f32
    %69 = vector.broadcast %cst_33 : f32 to vector<8x128xf32>
    %70 = arith.mulf %69, %68 : vector<8x128xf32>
    %71 = math.tanh %70 : vector<8x128xf32>
    %cst_34 = arith.constant 1.000000e+00 : f32
    %72 = vector.broadcast %cst_34 : f32 to vector<8x128xf32>
    %73 = arith.addf %72, %71 : vector<8x128xf32>
    %cst_35 = arith.constant 5.000000e-01 : f32
    %74 = vector.broadcast %cst_35 : f32 to vector<8x128xf32>
    %75 = arith.mulf %74, %73 : vector<8x128xf32>
    %76 = arith.mulf %63, %75 : vector<8x128xf32>
    %77 = arith.truncf %76 : vector<8x128xf32> to vector<8x128xbf16>
    %c0_36 = arith.constant 0 : index
    %c0_37 = arith.constant 0 : index
    %78 = vector.load %arg10[%c0_36, %c0_37] : memref<128x128xbf16, #tpu.memory_space<vmem>>, vector<128x128xbf16>
    %c0_38 = arith.constant 0 : index
    %c0_39 = arith.constant 0 : index
    %79 = vector.load %arg11[%c0_38, %c0_39] : memref<1x128xf32, #tpu.memory_space<vmem>>, vector<1x128xf32>
    %cst_40 = arith.constant dense<0.000000e+00> : vector<8x128xf32>
    %80 = tpu.matmul %77, %78, %cst_40 {dimension_numbers = #tpu.dot_dimension_numbers<[1], [0], [0], [1], [0, 0, 1, 1], [], []>} : vector<8x128xbf16>, vector<128x128xbf16>, vector<8x128xf32> -> vector<8x128xf32>
    %81 = vector.broadcast %79 : vector<1x128xf32> to vector<8x128xf32>
    %82 = arith.addf %80, %81 : vector<8x128xf32>
    %83 = arith.mulf %82, %82 : vector<8x128xf32>
    %84 = arith.mulf %82, %83 : vector<8x128xf32>
    %cst_41 = arith.constant 4.471500e-02 : f32
    %85 = vector.broadcast %cst_41 : f32 to vector<8x128xf32>
    %86 = arith.mulf %85, %84 : vector<8x128xf32>
    %87 = arith.addf %82, %86 : vector<8x128xf32>
    %cst_42 = arith.constant 0.797884583 : f32
    %88 = vector.broadcast %cst_42 : f32 to vector<8x128xf32>
    %89 = arith.mulf %88, %87 : vector<8x128xf32>
    %90 = math.tanh %89 : vector<8x128xf32>
    %cst_43 = arith.constant 1.000000e+00 : f32
    %91 = vector.broadcast %cst_43 : f32 to vector<8x128xf32>
    %92 = arith.addf %91, %90 : vector<8x128xf32>
    %cst_44 = arith.constant 5.000000e-01 : f32
    %93 = vector.broadcast %cst_44 : f32 to vector<8x128xf32>
    %94 = arith.mulf %93, %92 : vector<8x128xf32>
    %95 = arith.mulf %82, %94 : vector<8x128xf32>
    %96 = arith.truncf %95 : vector<8x128xf32> to vector<8x128xbf16>
    %c0_45 = arith.constant 0 : index
    %c0_46 = arith.constant 0 : index
    %97 = vector.load %arg12[%c0_45, %c0_46] : memref<128x128xbf16, #tpu.memory_space<vmem>>, vector<128x128xbf16>
    %c0_47 = arith.constant 0 : index
    %c0_48 = arith.constant 0 : index
    %98 = vector.load %arg13[%c0_47, %c0_48] : memref<1x128xf32, #tpu.memory_space<vmem>>, vector<1x128xf32>
    %cst_49 = arith.constant dense<0.000000e+00> : vector<8x128xf32>
    %99 = tpu.matmul %96, %97, %cst_49 {dimension_numbers = #tpu.dot_dimension_numbers<[1], [0], [0], [1], [0, 0, 1, 1], [], []>} : vector<8x128xbf16>, vector<128x128xbf16>, vector<8x128xf32> -> vector<8x128xf32>
    %100 = vector.broadcast %98 : vector<1x128xf32> to vector<8x128xf32>
    %101 = arith.addf %99, %100 : vector<8x128xf32>
    %102 = arith.mulf %101, %101 : vector<8x128xf32>
    %103 = arith.mulf %101, %102 : vector<8x128xf32>
    %cst_50 = arith.constant 4.471500e-02 : f32
    %104 = vector.broadcast %cst_50 : f32 to vector<8x128xf32>
    %105 = arith.mulf %104, %103 : vector<8x128xf32>
    %106 = arith.addf %101, %105 : vector<8x128xf32>
    %cst_51 = arith.constant 0.797884583 : f32
    %107 = vector.broadcast %cst_51 : f32 to vector<8x128xf32>
    %108 = arith.mulf %107, %106 : vector<8x128xf32>
    %109 = math.tanh %108 : vector<8x128xf32>
    %cst_52 = arith.constant 1.000000e+00 : f32
    %110 = vector.broadcast %cst_52 : f32 to vector<8x128xf32>
    %111 = arith.addf %110, %109 : vector<8x128xf32>
    %cst_53 = arith.constant 5.000000e-01 : f32
    %112 = vector.broadcast %cst_53 : f32 to vector<8x128xf32>
    %113 = arith.mulf %112, %111 : vector<8x128xf32>
    %114 = arith.mulf %101, %113 : vector<8x128xf32>
    %115 = arith.truncf %114 : vector<8x128xf32> to vector<8x128xbf16>
    %c0_54 = arith.constant 0 : index
    %c0_55 = arith.constant 0 : index
    %116 = vector.load %arg14[%c0_54, %c0_55] : memref<128x128xbf16, #tpu.memory_space<vmem>>, vector<128x128xbf16>
    %c0_56 = arith.constant 0 : index
    %c0_57 = arith.constant 0 : index
    %117 = vector.load %arg15[%c0_56, %c0_57] : memref<1x128xf32, #tpu.memory_space<vmem>>, vector<1x128xf32>
    %cst_58 = arith.constant dense<0.000000e+00> : vector<8x128xf32>
    %118 = tpu.matmul %115, %116, %cst_58 {dimension_numbers = #tpu.dot_dimension_numbers<[1], [0], [0], [1], [0, 0, 1, 1], [], []>} : vector<8x128xbf16>, vector<128x128xbf16>, vector<8x128xf32> -> vector<8x128xf32>
    %119 = vector.broadcast %117 : vector<1x128xf32> to vector<8x128xf32>
    %120 = arith.addf %118, %119 : vector<8x128xf32>
    %121 = arith.mulf %120, %120 : vector<8x128xf32>
    %122 = arith.mulf %120, %121 : vector<8x128xf32>
    %cst_59 = arith.constant 4.471500e-02 : f32
    %123 = vector.broadcast %cst_59 : f32 to vector<8x128xf32>
    %124 = arith.mulf %123, %122 : vector<8x128xf32>
    %125 = arith.addf %120, %124 : vector<8x128xf32>
    %cst_60 = arith.constant 0.797884583 : f32
    %126 = vector.broadcast %cst_60 : f32 to vector<8x128xf32>
    %127 = arith.mulf %126, %125 : vector<8x128xf32>
    %128 = math.tanh %127 : vector<8x128xf32>
    %cst_61 = arith.constant 1.000000e+00 : f32
    %129 = vector.broadcast %cst_61 : f32 to vector<8x128xf32>
    %130 = arith.addf %129, %128 : vector<8x128xf32>
    %cst_62 = arith.constant 5.000000e-01 : f32
    %131 = vector.broadcast %cst_62 : f32 to vector<8x128xf32>
    %132 = arith.mulf %131, %130 : vector<8x128xf32>
    %133 = arith.mulf %120, %132 : vector<8x128xf32>
    %134 = arith.truncf %133 : vector<8x128xf32> to vector<8x128xbf16>
    %c0_63 = arith.constant 0 : index
    %c0_64 = arith.constant 0 : index
    %135 = vector.load %arg16[%c0_63, %c0_64] : memref<128x128xbf16, #tpu.memory_space<vmem>>, vector<128x128xbf16>
    %c0_65 = arith.constant 0 : index
    %c0_66 = arith.constant 0 : index
    %136 = vector.load %arg17[%c0_65, %c0_66] : memref<1x128xf32, #tpu.memory_space<vmem>>, vector<1x128xf32>
    %cst_67 = arith.constant dense<0.000000e+00> : vector<8x128xf32>
    %137 = tpu.matmul %134, %135, %cst_67 {dimension_numbers = #tpu.dot_dimension_numbers<[1], [0], [0], [1], [0, 0, 1, 1], [], []>} : vector<8x128xbf16>, vector<128x128xbf16>, vector<8x128xf32> -> vector<8x128xf32>
    %138 = vector.broadcast %136 : vector<1x128xf32> to vector<8x128xf32>
    %139 = arith.addf %137, %138 : vector<8x128xf32>
    %140 = arith.mulf %139, %139 : vector<8x128xf32>
    %141 = arith.mulf %139, %140 : vector<8x128xf32>
    %cst_68 = arith.constant 4.471500e-02 : f32
    %142 = vector.broadcast %cst_68 : f32 to vector<8x128xf32>
    %143 = arith.mulf %142, %141 : vector<8x128xf32>
    %144 = arith.addf %139, %143 : vector<8x128xf32>
    %cst_69 = arith.constant 0.797884583 : f32
    %145 = vector.broadcast %cst_69 : f32 to vector<8x128xf32>
    %146 = arith.mulf %145, %144 : vector<8x128xf32>
    %147 = math.tanh %146 : vector<8x128xf32>
    %cst_70 = arith.constant 1.000000e+00 : f32
    %148 = vector.broadcast %cst_70 : f32 to vector<8x128xf32>
    %149 = arith.addf %148, %147 : vector<8x128xf32>
    %cst_71 = arith.constant 5.000000e-01 : f32
    %150 = vector.broadcast %cst_71 : f32 to vector<8x128xf32>
    %151 = arith.mulf %150, %149 : vector<8x128xf32>
    %152 = arith.mulf %139, %151 : vector<8x128xf32>
    %153 = arith.truncf %152 : vector<8x128xf32> to vector<8x128xbf16>
    %c0_72 = arith.constant 0 : index
    %c0_73 = arith.constant 0 : index
    %154 = vector.load %arg18[%c0_72, %c0_73] : memref<128x128xbf16, #tpu.memory_space<vmem>>, vector<128x128xbf16>
    %c0_74 = arith.constant 0 : index
    %c0_75 = arith.constant 0 : index
    %155 = vector.load %arg19[%c0_74, %c0_75] : memref<1x128xf32, #tpu.memory_space<vmem>>, vector<1x128xf32>
    %cst_76 = arith.constant dense<0.000000e+00> : vector<8x128xf32>
    %156 = tpu.matmul %153, %154, %cst_76 {dimension_numbers = #tpu.dot_dimension_numbers<[1], [0], [0], [1], [0, 0, 1, 1], [], []>} : vector<8x128xbf16>, vector<128x128xbf16>, vector<8x128xf32> -> vector<8x128xf32>
    %157 = vector.broadcast %155 : vector<1x128xf32> to vector<8x128xf32>
    %158 = arith.addf %156, %157 : vector<8x128xf32>
    %c0_77 = arith.constant 0 : index
    %c0_78 = arith.constant 0 : index
    %159 = vector.load %arg20[%c0_77, %c0_78] : memref<8x128xf32, #tpu.memory_space<vmem>>, vector<8x128xf32>
    tpu.vector_store %arg20[%c0_77, %c0_78], %158 {strides = array<i32>} : memref<8x128xf32, #tpu.memory_space<vmem>>, vector<8x128xf32>,
    return
  }
  func.func @transform_0(%arg0: i32) -> (i32, i32) {
    %c0_i32 = arith.constant 0 : i32
    %c0_i32_0 = arith.constant 0 : i32
    return %arg0, %c0_i32 : i32, i32
  }
  func.func @transform_1(%arg0: i32) -> (i32, i32) {
    %c0_i32 = arith.constant 0 : i32
    %c0_i32_0 = arith.constant 0 : i32
    %c0_i32_1 = arith.constant 0 : i32
    return %c0_i32, %c0_i32_0 : i32, i32
  }
  func.func @transform_2(%arg0: i32) -> (i32, i32) {
    %c0_i32 = arith.constant 0 : i32
    %c0_i32_0 = arith.constant 0 : i32
    %c0_i32_1 = arith.constant 0 : i32
    return %c0_i32, %c0_i32_0 : i32, i32
  }
  func.func @transform_3(%arg0: i32) -> (i32, i32) {
    %c0_i32 = arith.constant 0 : i32
    %c0_i32_0 = arith.constant 0 : i32
    %c0_i32_1 = arith.constant 0 : i32
    return %c0_i32, %c0_i32_0 : i32, i32
  }
  func.func @transform_4(%arg0: i32) -> (i32, i32) {
    %c0_i32 = arith.constant 0 : i32
    %c0_i32_0 = arith.constant 0 : i32
    %c0_i32_1 = arith.constant 0 : i32
    return %c0_i32, %c0_i32_0 : i32, i32
  }
  func.func @transform_5(%arg0: i32) -> (i32, i32) {
    %c0_i32 = arith.constant 0 : i32
    %c0_i32_0 = arith.constant 0 : i32
    %c0_i32_1 = arith.constant 0 : i32
    return %c0_i32, %c0_i32_0 : i32, i32
  }
  func.func @transform_6(%arg0: i32) -> (i32, i32) {
    %c0_i32 = arith.constant 0 : i32
    %c0_i32_0 = arith.constant 0 : i32
    %c0_i32_1 = arith.constant 0 : i32
    return %c0_i32, %c0_i32_0 : i32, i32
  }
  func.func @transform_7(%arg0: i32) -> (i32, i32) {
    %c0_i32 = arith.constant 0 : i32
    %c0_i32_0 = arith.constant 0 : i32
    %c0_i32_1 = arith.constant 0 : i32
    return %c0_i32, %c0_i32_0 : i32, i32
  }
  func.func @transform_8(%arg0: i32) -> (i32, i32) {
    %c0_i32 = arith.constant 0 : i32
    %c0_i32_0 = arith.constant 0 : i32
    %c0_i32_1 = arith.constant 0 : i32
    return %c0_i32, %c0_i32_0 : i32, i32
  }
  func.func @transform_9(%arg0: i32) -> (i32, i32) {
    %c0_i32 = arith.constant 0 : i32
    %c0_i32_0 = arith.constant 0 : i32
    %c0_i32_1 = arith.constant 0 : i32
    return %c0_i32, %c0_i32_0 : i32, i32
  }
  func.func @transform_10(%arg0: i32) -> (i32, i32) {
    %c0_i32 = arith.constant 0 : i32
    %c0_i32_0 = arith.constant 0 : i32
    %c0_i32_1 = arith.constant 0 : i32
    return %c0_i32, %c0_i32_0 : i32, i32
  }
  func.func @transform_11(%arg0: i32) -> (i32, i32) {
    %c0_i32 = arith.constant 0 : i32
    %c0_i32_0 = arith.constant 0 : i32
    %c0_i32_1 = arith.constant 0 : i32
    return %c0_i32, %c0_i32_0 : i32, i32
  }
  func.func @transform_12(%arg0: i32) -> (i32, i32) {
    %c0_i32 = arith.constant 0 : i32
    %c0_i32_0 = arith.constant 0 : i32
    %c0_i32_1 = arith.constant 0 : i32
    return %c0_i32, %c0_i32_0 : i32, i32
  }
  func.func @transform_13(%arg0: i32) -> (i32, i32) {
    %c0_i32 = arith.constant 0 : i32
    %c0_i32_0 = arith.constant 0 : i32
    %c0_i32_1 = arith.constant 0 : i32
    return %c0_i32, %c0_i32_0 : i32, i32
  }
  func.func @transform_14(%arg0: i32) -> (i32, i32) {
    %c0_i32 = arith.constant 0 : i32
    %c0_i32_0 = arith.constant 0 : i32
    %c0_i32_1 = arith.constant 0 : i32
    return %c0_i32, %c0_i32_0 : i32, i32
  }
  func.func @transform_15(%arg0: i32) -> (i32, i32) {
    %c0_i32 = arith.constant 0 : i32
    %c0_i32_0 = arith.constant 0 : i32
    %c0_i32_1 = arith.constant 0 : i32
    return %c0_i32, %c0_i32_0 : i32, i32
  }
  func.func @transform_16(%arg0: i32) -> (i32, i32) {
    %c0_i32 = arith.constant 0 : i32
    %c0_i32_0 = arith.constant 0 : i32
    %c0_i32_1 = arith.constant 0 : i32
    return %c0_i32, %c0_i32_0 : i32, i32
  }
  func.func @transform_17(%arg0: i32) -> (i32, i32) {
    %c0_i32 = arith.constant 0 : i32
    %c0_i32_0 = arith.constant 0 : i32
    %c0_i32_1 = arith.constant 0 : i32
    return %c0_i32, %c0_i32_0 : i32, i32
  }
  func.func @transform_18(%arg0: i32) -> (i32, i32) {
    %c0_i32 = arith.constant 0 : i32
    %c0_i32_0 = arith.constant 0 : i32
    %c0_i32_1 = arith.constant 0 : i32
    return %c0_i32, %c0_i32_0 : i32, i32
  }
  func.func @transform_19(%arg0: i32) -> (i32, i32) {
    %c0_i32 = arith.constant 0 : i32
    %c0_i32_0 = arith.constant 0 : i32
    return %arg0, %c0_i32 : i32, i32
  }
}

</mosaic_0001>

<llo_original>
// kernel: simple_mlp_gelu.1
$region0: #{simple_mlp_gelu.1}
  #allocation0 [shape = 'u32[]', space=smem, size = 0x4, offset = 0x4, fixed_abs, tag = 'smem constant byte address 0x4 - core index']
  #allocation1 [shape = 'u32[144,128]{1,0:T(1,128)}', space=vmem, size = 0x12000, scoped, tag = 'internal scratch']
  %s0 = inlined_call_operand.vmem [shape: f32[12,784], index: 0, kind: input, shape index: {}]
  %s1 = inlined_call_operand.vmem [shape: bf16[784,128], index: 1, kind: input, shape index: {}]
  %s2 = inlined_call_operand.vmem [shape: f32[1,128], index: 2, kind: input, shape index: {}]
  %s3 = inlined_call_operand.vmem [shape: bf16[128,128], index: 3, kind: input, shape index: {}]
  %s4 = inlined_call_operand.vmem [shape: f32[1,128], index: 4, kind: input, shape index: {}]
  %s5 = inlined_call_operand.vmem [shape: bf16[128,128], index: 5, kind: input, shape index: {}]
  %s6 = inlined_call_operand.vmem [shape: f32[1,128], index: 6, kind: input, shape index: {}]
  %s7 = inlined_call_operand.vmem [shape: bf16[128,128], index: 7, kind: input, shape index: {}]
  %s8 = inlined_call_operand.vmem [shape: f32[1,128], index: 8, kind: input, shape index: {}]
  %s9 = inlined_call_operand.vmem [shape: bf16[128,128], index: 9, kind: input, shape index: {}]
  %s10 = inlined_call_operand.vmem [shape: f32[1,128], index: 10, kind: input, shape index: {}]
  %s11 = inlined_call_operand.vmem [shape: bf16[128,128], index: 11, kind: input, shape index: {}]
  %s12 = inlined_call_operand.vmem [shape: f32[1,128], index: 12, kind: input, shape index: {}]
  %s13 = inlined_call_operand.vmem [shape: bf16[128,128], index: 13, kind: input, shape index: {}]
  %s14 = inlined_call_operand.vmem [shape: f32[1,128], index: 14, kind: input, shape index: {}]
  %s15 = inlined_call_operand.vmem [shape: bf16[128,128], index: 15, kind: input, shape index: {}]
  %s16 = inlined_call_operand.vmem [shape: f32[1,128], index: 16, kind: input, shape index: {}]
  %s17 = inlined_call_operand.vmem [shape: bf16[128,128], index: 17, kind: input, shape index: {}]
  %s18 = inlined_call_operand.vmem [shape: f32[1,128], index: 18, kind: input, shape index: {}]
  %s19 = inlined_call_operand.hbm [shape: f32[16,128], index: 19, kind: output, shape index: {}]
  %s20 = sld [smem:[#allocation0]]
  $region109: #{simple_mlp_gelu.1} parent=0
    _
  %s22 = ssub.s32 1, %s20
  %s23 = scalar_select 0, %s22, %s20
  $region1: #{simple_mlp_gelu.1} parent=0
    #allocation2 [shape = 'u8[8192]{0}', space=vmem, size = 0x2000, scoped, tag = 'output window, operand 0']
    #allocation3 [shape = 's32[2]{0}', space=sflag, size = 0x8, scoped, tag = 'scoped memory for simple_mlp_gelu.1']
    %24 = vsyncpa [#allocation3], 0
    %s25 = scalar_lea.sflag [#allocation3], 1
    %26 = vsyncpa %s25, 0
    loop: start=0, step=1, limit=4
    $region2: #{simple_mlp_gelu.1} parent=1 // loop_pre_header
      _
    $region3: #{simple_mlp_gelu.1} parent=1 // loop_header
      %s28 = sphi 0, %s32
      %p29 = scmp.ge.s32.totalorder %s28, 4
      %s38 = sphi 0, %s40
      %s41 = sphi 0, %s38
      %s42 = sphi 0, %s41
      %s58 = sphi 0, %s42
      %s62 = sphi 0, %s62
      %s64 = sphi 0, %s62
      %s65 = sphi 0, %s64
      %s79 = sphi 0, %s65
      %s83 = sphi 0, %s83
      %s85 = sphi 0, %s83
      %s86 = sphi 0, %s85
      %s100 = sphi 0, %s86
      %s104 = sphi 0, %s104
      %s106 = sphi 0, %s104
      %s107 = sphi 0, %s106
      %s121 = sphi 0, %s107
      %s125 = sphi 0, %s125
      %s127 = sphi 0, %s125
      %s128 = sphi 0, %s127
      %s142 = sphi 0, %s128
      %s146 = sphi 0, %s146
      %s148 = sphi 0, %s146
      %s149 = sphi 0, %s148
      %s163 = sphi 0, %s149
      %s167 = sphi 0, %s167
      %s169 = sphi 0, %s167
      %s170 = sphi 0, %s169
      %s184 = sphi 0, %s170
      %s188 = sphi 0, %s188
      %s190 = sphi 0, %s188
      %s191 = sphi 0, %s190
      %s205 = sphi 0, %s191
      %s209 = sphi 0, %s209
      %s211 = sphi 0, %s209
      %s212 = sphi 0, %s211
      %s226 = sphi 0, %s212
      %s230 = sphi 0, %s230
      %s232 = sphi 0, %s230
      %s233 = sphi 0, %s232
      %s247 = sphi 0, %s233
      %s251 = sphi 0, %s251
      %s253 = sphi 0, %s251
      %s254 = sphi 0, %s253
      %s268 = sphi 0, %s254
      %s272 = sphi 0, %s272
      %s274 = sphi 0, %s272
      %s275 = sphi 0, %s274
      %s289 = sphi 0, %s275
      %s293 = sphi 0, %s293
      %s295 = sphi 0, %s293
      %s296 = sphi 0, %s295
      %s310 = sphi 0, %s296
      %s314 = sphi 0, %s314
      %s316 = sphi 0, %s314
      %s317 = sphi 0, %s316
      %s331 = sphi 0, %s317
      %s335 = sphi 0, %s335
      %s337 = sphi 0, %s335
      %s338 = sphi 0, %s337
      %s352 = sphi 0, %s338
      %s356 = sphi 0, %s356
      %s358 = sphi 0, %s356
      %s359 = sphi 0, %s358
      %s373 = sphi 0, %s359
      %s377 = sphi 0, %s377
      %s379 = sphi 0, %s377
      %s380 = sphi 0, %s379
      %s394 = sphi 0, %s380
      %s398 = sphi 0, %s398
      %s400 = sphi 0, %s398
      %s401 = sphi 0, %s400
      %s415 = sphi 0, %s401
      %s419 = sphi 0, %s419
      %s421 = sphi 0, %s419
      %s422 = sphi 0, %s421
      %s436 = sphi 0, %s422
      %s442 = sphi 0, %s444
      %s445 = sphi 0, %s442
      %s446 = sphi 0, %s445
      %s462 = sphi 0, %s446
    $region4: #{simple_mlp_gelu.1} parent=1 // loop_header_branch
      %31 = sbr.rel (%p29) target = $region8
    $region5: #{simple_mlp_gelu.1} parent=1 // loop_body
      %s33 = ssub.s32 %s28, 1
      %s34 = ssub.s32 %s28, 2
      %s35 = sadd.s32 %s28, 1
      %s36 = ssub.s32 %s28, %s35
      %p37 = scmp.eq.s32.totalorder %s36, 0
      %s39 = sadd.s32 %s38, 1
      %s40 = scalar_select %p37, %s38, %s39
      %p43 = pneg %p37
      %p44 = scmp.eq.s32.totalorder %s28, 1
      %p45 = por %p43, %p44
      %p46 = scmp.ne.s32.totalorder %s38, %s41
      %p47 = scmp.eq.s32.totalorder %s28, 0
      %p48 = por %p46, %p47
      %p49 = scmp.ne.s32.totalorder %s38, %s41
      %p50 = scmp.eq.s32.totalorder %s33, 1
      %p51 = por %p49, %p50
      %p52 = scmp.ne.s32.totalorder %s41, %s42
      %p53 = scmp.eq.s32.totalorder %s33, 0
      %p54 = por %p52, %p53
      %p55 = scmp.ne.s32.totalorder %s41, %s42
      %p56 = scmp.eq.s32.totalorder %s34, 1
      %p57 = por %p55, %p56
      %p59 = scmp.ne.s32.totalorder %s42, %s58
      %p60 = scmp.eq.s32.totalorder %s34, 0
      %p61 = por %p59, %p60
      %s63 = sadd.s32 %s62, 1
      %p66 = scmp.eq.s32.totalorder %s28, 1
      %p67 = scmp.ne.s32.totalorder %s62, %s64
      %p68 = scmp.eq.s32.totalorder %s28, 0
      %p69 = por %p67, %p68
      %p70 = scmp.ne.s32.totalorder %s62, %s64
      %p71 = scmp.eq.s32.totalorder %s33, 1
      %p72 = por %p70, %p71
      %p73 = scmp.ne.s32.totalorder %s64, %s65
      %p74 = scmp.eq.s32.totalorder %s33, 0
      %p75 = por %p73, %p74
      %p76 = scmp.ne.s32.totalorder %s64, %s65
      %p77 = scmp.eq.s32.totalorder %s34, 1
      %p78 = por %p76, %p77
      %p80 = scmp.ne.s32.totalorder %s65, %s79
      %p81 = scmp.eq.s32.totalorder %s34, 0
      %p82 = por %p80, %p81
      %s84 = sadd.s32 %s83, 1
      %p87 = scmp.eq.s32.totalorder %s28, 1
      %p88 = scmp.ne.s32.totalorder %s83, %s85
      %p89 = scmp.eq.s32.totalorder %s28, 0
      %p90 = por %p88, %p89
      %p91 = scmp.ne.s32.totalorder %s83, %s85
      %p92 = scmp.eq.s32.totalorder %s33, 1
      %p93 = por %p91, %p92
      %p94 = scmp.ne.s32.totalorder %s85, %s86
      %p95 = scmp.eq.s32.totalorder %s33, 0
      %p96 = por %p94, %p95
      %p97 = scmp.ne.s32.totalorder %s85, %s86
      %p98 = scmp.eq.s32.totalorder %s34, 1
      %p99 = por %p97, %p98
      %p101 = scmp.ne.s32.totalorder %s86, %s100
      %p102 = scmp.eq.s32.totalorder %s34, 0
      %p103 = por %p101, %p102
      %s105 = sadd.s32 %s104, 1
      %p108 = scmp.eq.s32.totalorder %s28, 1
      %p109 = scmp.ne.s32.totalorder %s104, %s106
      %p110 = scmp.eq.s32.totalorder %s28, 0
      %p111 = por %p109, %p110
      %p112 = scmp.ne.s32.totalorder %s104, %s106
      %p113 = scmp.eq.s32.totalorder %s33, 1
      %p114 = por %p112, %p113
      %p115 = scmp.ne.s32.totalorder %s106, %s107
      %p116 = scmp.eq.s32.totalorder %s33, 0
      %p117 = por %p115, %p116
      %p118 = scmp.ne.s32.totalorder %s106, %s107
      %p119 = scmp.eq.s32.totalorder %s34, 1
      %p120 = por %p118, %p119
      %p122 = scmp.ne.s32.totalorder %s107, %s121
      %p123 = scmp.eq.s32.totalorder %s34, 0
      %p124 = por %p122, %p123
      %s126 = sadd.s32 %s125, 1
      %p129 = scmp.eq.s32.totalorder %s28, 1
      %p130 = scmp.ne.s32.totalorder %s125, %s127
      %p131 = scmp.eq.s32.totalorder %s28, 0
      %p132 = por %p130, %p131
      %p133 = scmp.ne.s32.totalorder %s125, %s127
      %p134 = scmp.eq.s32.totalorder %s33, 1
      %p135 = por %p133, %p134
      %p136 = scmp.ne.s32.totalorder %s127, %s128
      %p137 = scmp.eq.s32.totalorder %s33, 0
      %p138 = por %p136, %p137
      %p139 = scmp.ne.s32.totalorder %s127, %s128
      %p140 = scmp.eq.s32.totalorder %s34, 1
      %p141 = por %p139, %p140
      %p143 = scmp.ne.s32.totalorder %s128, %s142
      %p144 = scmp.eq.s32.totalorder %s34, 0
      %p145 = por %p143, %p144
      %s147 = sadd.s32 %s146, 1
      %p150 = scmp.eq.s32.totalorder %s28, 1
      %p151 = scmp.ne.s32.totalorder %s146, %s148
      %p152 = scmp.eq.s32.totalorder %s28, 0
      %p153 = por %p151, %p152
      %p154 = scmp.ne.s32.totalorder %s146, %s148
      %p155 = scmp.eq.s32.totalorder %s33, 1
      %p156 = por %p154, %p155
      %p157 = scmp.ne.s32.totalorder %s148, %s149
      %p158 = scmp.eq.s32.totalorder %s33, 0
      %p159 = por %p157, %p158
      %p160 = scmp.ne.s32.totalorder %s148, %s149
      %p161 = scmp.eq.s32.totalorder %s34, 1
      %p162 = por %p160, %p161
      %p164 = scmp.ne.s32.totalorder %s149, %s163
      %p165 = scmp.eq.s32.totalorder %s34, 0
      %p166 = por %p164, %p165
      %s168 = sadd.s32 %s167, 1
      %p171 = scmp.eq.s32.totalorder %s28, 1
      %p172 = scmp.ne.s32.totalorder %s167, %s169
      %p173 = scmp.eq.s32.totalorder %s28, 0
      %p174 = por %p172, %p173
      %p175 = scmp.ne.s32.totalorder %s167, %s169
      %p176 = scmp.eq.s32.totalorder %s33, 1
      %p177 = por %p175, %p176
      %p178 = scmp.ne.s32.totalorder %s169, %s170
      %p179 = scmp.eq.s32.totalorder %s33, 0
      %p180 = por %p178, %p179
      %p181 = scmp.ne.s32.totalorder %s169, %s170
      %p182 = scmp.eq.s32.totalorder %s34, 1
      %p183 = por %p181, %p182
      %p185 = scmp.ne.s32.totalorder %s170, %s184
      %p186 = scmp.eq.s32.totalorder %s34, 0
      %p187 = por %p185, %p186
      %s189 = sadd.s32 %s188, 1
      %p192 = scmp.eq.s32.totalorder %s28, 1
      %p193 = scmp.ne.s32.totalorder %s188, %s190
      %p194 = scmp.eq.s32.totalorder %s28, 0
      %p195 = por %p193, %p194
      %p196 = scmp.ne.s32.totalorder %s188, %s190
      %p197 = scmp.eq.s32.totalorder %s33, 1
      %p198 = por %p196, %p197
      %p199 = scmp.ne.s32.totalorder %s190, %s191
      %p200 = scmp.eq.s32.totalorder %s33, 0
      %p201 = por %p199, %p200
      %p202 = scmp.ne.s32.totalorder %s190, %s191
      %p203 = scmp.eq.s32.totalorder %s34, 1
      %p204 = por %p202, %p203
      %p206 = scmp.ne.s32.totalorder %s191, %s205
      %p207 = scmp.eq.s32.totalorder %s34, 0
      %p208 = por %p206, %p207
      %s210 = sadd.s32 %s209, 1
      %p213 = scmp.eq.s32.totalorder %s28, 1
      %p214 = scmp.ne.s32.totalorder %s209, %s211
      %p215 = scmp.eq.s32.totalorder %s28, 0
      %p216 = por %p214, %p215
      %p217 = scmp.ne.s32.totalorder %s209, %s211
      %p218 = scmp.eq.s32.totalorder %s33, 1
      %p219 = por %p217, %p218
      %p220 = scmp.ne.s32.totalorder %s211, %s212
      %p221 = scmp.eq.s32.totalorder %s33, 0
      %p222 = por %p220, %p221
      %p223 = scmp.ne.s32.totalorder %s211, %s212
      %p224 = scmp.eq.s32.totalorder %s34, 1
      %p225 = por %p223, %p224
      %p227 = scmp.ne.s32.totalorder %s212, %s226
      %p228 = scmp.eq.s32.totalorder %s34, 0
      %p229 = por %p227, %p228
      %s231 = sadd.s32 %s230, 1
      %p234 = scmp.eq.s32.totalorder %s28, 1
      %p235 = scmp.ne.s32.totalorder %s230, %s232
      %p236 = scmp.eq.s32.totalorder %s28, 0
      %p237 = por %p235, %p236
      %p238 = scmp.ne.s32.totalorder %s230, %s232
      %p239 = scmp.eq.s32.totalorder %s33, 1
      %p240 = por %p238, %p239
      %p241 = scmp.ne.s32.totalorder %s232, %s233
      %p242 = scmp.eq.s32.totalorder %s33, 0
      %p243 = por %p241, %p242
      %p244 = scmp.ne.s32.totalorder %s232, %s233
      %p245 = scmp.eq.s32.totalorder %s34, 1
      %p246 = por %p244, %p245
      %p248 = scmp.ne.s32.totalorder %s233, %s247
      %p249 = scmp.eq.s32.totalorder %s34, 0
      %p250 = por %p248, %p249
      %s252 = sadd.s32 %s251, 1
      %p255 = scmp.eq.s32.totalorder %s28, 1
      %p256 = scmp.ne.s32.totalorder %s251, %s253
      %p257 = scmp.eq.s32.totalorder %s28, 0
      %p258 = por %p256, %p257
      %p259 = scmp.ne.s32.totalorder %s251, %s253
      %p260 = scmp.eq.s32.totalorder %s33, 1
      %p261 = por %p259, %p260
      %p262 = scmp.ne.s32.totalorder %s253, %s254
      %p263 = scmp.eq.s32.totalorder %s33, 0
      %p264 = por %p262, %p263
      %p265 = scmp.ne.s32.totalorder %s253, %s254
      %p266 = scmp.eq.s32.totalorder %s34, 1
      %p267 = por %p265, %p266
      %p269 = scmp.ne.s32.totalorder %s254, %s268
      %p270 = scmp.eq.s32.totalorder %s34, 0
      %p271 = por %p269, %p270
      %s273 = sadd.s32 %s272, 1
      %p276 = scmp.eq.s32.totalorder %s28, 1
      %p277 = scmp.ne.s32.totalorder %s272, %s274
      %p278 = scmp.eq.s32.totalorder %s28, 0
      %p279 = por %p277, %p278
      %p280 = scmp.ne.s32.totalorder %s272, %s274
      %p281 = scmp.eq.s32.totalorder %s33, 1
      %p282 = por %p280, %p281
      %p283 = scmp.ne.s32.totalorder %s274, %s275
      %p284 = scmp.eq.s32.totalorder %s33, 0
      %p285 = por %p283, %p284
      %p286 = scmp.ne.s32.totalorder %s274, %s275
      %p287 = scmp.eq.s32.totalorder %s34, 1
      %p288 = por %p286, %p287
      %p290 = scmp.ne.s32.totalorder %s275, %s289
      %p291 = scmp.eq.s32.totalorder %s34, 0
      %p292 = por %p290, %p291
      %s294 = sadd.s32 %s293, 1
      %p297 = scmp.eq.s32.totalorder %s28, 1
      %p298 = scmp.ne.s32.totalorder %s293, %s295
      %p299 = scmp.eq.s32.totalorder %s28, 0
      %p300 = por %p298, %p299
      %p301 = scmp.ne.s32.totalorder %s293, %s295
      %p302 = scmp.eq.s32.totalorder %s33, 1
      %p303 = por %p301, %p302
      %p304 = scmp.ne.s32.totalorder %s295, %s296
      %p305 = scmp.eq.s32.totalorder %s33, 0
      %p306 = por %p304, %p305
      %p307 = scmp.ne.s32.totalorder %s295, %s296
      %p308 = scmp.eq.s32.totalorder %s34, 1
      %p309 = por %p307, %p308
      %p311 = scmp.ne.s32.totalorder %s296, %s310
      %p312 = scmp.eq.s32.totalorder %s34, 0
      %p313 = por %p311, %p312
      %s315 = sadd.s32 %s314, 1
      %p318 = scmp.eq.s32.totalorder %s28, 1
      %p319 = scmp.ne.s32.totalorder %s314, %s316
      %p320 = scmp.eq.s32.totalorder %s28, 0
      %p321 = por %p319, %p320
      %p322 = scmp.ne.s32.totalorder %s314, %s316
      %p323 = scmp.eq.s32.totalorder %s33, 1
      %p324 = por %p322, %p323
      %p325 = scmp.ne.s32.totalorder %s316, %s317
      %p326 = scmp.eq.s32.totalorder %s33, 0
      %p327 = por %p325, %p326
      %p328 = scmp.ne.s32.totalorder %s316, %s317
      %p329 = scmp.eq.s32.totalorder %s34, 1
      %p330 = por %p328, %p329
      %p332 = scmp.ne.s32.totalorder %s317, %s331
      %p333 = scmp.eq.s32.totalorder %s34, 0
      %p334 = por %p332, %p333
      %s336 = sadd.s32 %s335, 1
      %p339 = scmp.eq.s32.totalorder %s28, 1
      %p340 = scmp.ne.s32.totalorder %s335, %s337
      %p341 = scmp.eq.s32.totalorder %s28, 0
      %p342 = por %p340, %p341
      %p343 = scmp.ne.s32.totalorder %s335, %s337
      %p344 = scmp.eq.s32.totalorder %s33, 1
      %p345 = por %p343, %p344
      %p346 = scmp.ne.s32.totalorder %s337, %s338
      %p347 = scmp.eq.s32.totalorder %s33, 0
      %p348 = por %p346, %p347
      %p349 = scmp.ne.s32.totalorder %s337, %s338
      %p350 = scmp.eq.s32.totalorder %s34, 1
      %p351 = por %p349, %p350
      %p353 = scmp.ne.s32.totalorder %s338, %s352
      %p354 = scmp.eq.s32.totalorder %s34, 0
      %p355 = por %p353, %p354
      %s357 = sadd.s32 %s356, 1
      %p360 = scmp.eq.s32.totalorder %s28, 1
      %p361 = scmp.ne.s32.totalorder %s356, %s358
      %p362 = scmp.eq.s32.totalorder %s28, 0
      %p363 = por %p361, %p362
      %p364 = scmp.ne.s32.totalorder %s356, %s358
      %p365 = scmp.eq.s32.totalorder %s33, 1
      %p366 = por %p364, %p365
      %p367 = scmp.ne.s32.totalorder %s358, %s359
      %p368 = scmp.eq.s32.totalorder %s33, 0
      %p369 = por %p367, %p368
      %p370 = scmp.ne.s32.totalorder %s358, %s359
      %p371 = scmp.eq.s32.totalorder %s34, 1
      %p372 = por %p370, %p371
      %p374 = scmp.ne.s32.totalorder %s359, %s373
      %p375 = scmp.eq.s32.totalorder %s34, 0
      %p376 = por %p374, %p375
      %s378 = sadd.s32 %s377, 1
      %p381 = scmp.eq.s32.totalorder %s28, 1
      %p382 = scmp.ne.s32.totalorder %s377, %s379
      %p383 = scmp.eq.s32.totalorder %s28, 0
      %p384 = por %p382, %p383
      %p385 = scmp.ne.s32.totalorder %s377, %s379
      %p386 = scmp.eq.s32.totalorder %s33, 1
      %p387 = por %p385, %p386
      %p388 = scmp.ne.s32.totalorder %s379, %s380
      %p389 = scmp.eq.s32.totalorder %s33, 0
      %p390 = por %p388, %p389
      %p391 = scmp.ne.s32.totalorder %s379, %s380
      %p392 = scmp.eq.s32.totalorder %s34, 1
      %p393 = por %p391, %p392
      %p395 = scmp.ne.s32.totalorder %s380, %s394
      %p396 = scmp.eq.s32.totalorder %s34, 0
      %p397 = por %p395, %p396
      %s399 = sadd.s32 %s398, 1
      %p402 = scmp.eq.s32.totalorder %s28, 1
      %p403 = scmp.ne.s32.totalorder %s398, %s400
      %p404 = scmp.eq.s32.totalorder %s28, 0
      %p405 = por %p403, %p404
      %p406 = scmp.ne.s32.totalorder %s398, %s400
      %p407 = scmp.eq.s32.totalorder %s33, 1
      %p408 = por %p406, %p407
      %p409 = scmp.ne.s32.totalorder %s400, %s401
      %p410 = scmp.eq.s32.totalorder %s33, 0
      %p411 = por %p409, %p410
      %p412 = scmp.ne.s32.totalorder %s400, %s401
      %p413 = scmp.eq.s32.totalorder %s34, 1
      %p414 = por %p412, %p413
      %p416 = scmp.ne.s32.totalorder %s401, %s415
      %p417 = scmp.eq.s32.totalorder %s34, 0
      %p418 = por %p416, %p417
      %s420 = sadd.s32 %s419, 1
      %p423 = scmp.eq.s32.totalorder %s28, 1
      %p424 = scmp.ne.s32.totalorder %s419, %s421
      %p425 = scmp.eq.s32.totalorder %s28, 0
      %p426 = por %p424, %p425
      %p427 = scmp.ne.s32.totalorder %s419, %s421
      %p428 = scmp.eq.s32.totalorder %s33, 1
      %p429 = por %p427, %p428
      %p430 = scmp.ne.s32.totalorder %s421, %s422
      %p431 = scmp.eq.s32.totalorder %s33, 0
      %p432 = por %p430, %p431
      %p433 = scmp.ne.s32.totalorder %s421, %s422
      %p434 = scmp.eq.s32.totalorder %s34, 1
      %p435 = por %p433, %p434
      %p437 = scmp.ne.s32.totalorder %s422, %s436
      %p438 = scmp.eq.s32.totalorder %s34, 0
      %p439 = por %p437, %p438
      %s440 = ssub.s32 %s28, %s35
      %p441 = scmp.eq.s32.totalorder %s440, 0
      %s443 = sadd.s32 %s442, 1
      %s444 = scalar_select %p441, %s442, %s443
      %p447 = pneg %p441
      %p448 = scmp.eq.s32.totalorder %s28, 1
      %p449 = por %p447, %p448
      %p450 = scmp.ne.s32.totalorder %s442, %s445
      %p451 = scmp.eq.s32.totalorder %s28, 0
      %p452 = por %p450, %p451
      %p453 = scmp.ne.s32.totalorder %s442, %s445
      %p454 = scmp.eq.s32.totalorder %s33, 1
      %p455 = por %p453, %p454
      %p456 = scmp.ne.s32.totalorder %s445, %s446
      %p457 = scmp.eq.s32.totalorder %s33, 0
      %p458 = por %p456, %p457
      %p459 = scmp.ne.s32.totalorder %s445, %s446
      %p460 = scmp.eq.s32.totalorder %s34, 1
      %p461 = por %p459, %p460
      %p463 = scmp.ne.s32.totalorder %s446, %s462
      %p464 = scmp.eq.s32.totalorder %s34, 0
      %p465 = por %p463, %p464
      %p466 = scmp.le.s32.totalorder 1, %s28
      %p467 = scmp.lt.s32.totalorder %s28, 3
      %p468 = pnand %p466, %p467
      %p469 = pneg %p468
      // Predicated region
      $region9: #{simple_mlp_gelu.1} parent=5 // pred_check
        _
      $region10: #{simple_mlp_gelu.1} parent=5 // pred_check_branch
        %471 = sbr.rel (%p468) target = $region12
      $region11: #{simple_mlp_gelu.1} parent=5 // pred_region
        %s472 = ssub.s32 %s28, 1
        // Predicated region
        $region13: #{simple_mlp_gelu.1} parent=11 // pred_check
          %p473 = pneg %p75
        $region14: #{simple_mlp_gelu.1} parent=11 // pred_check_branch
          %475 = sbr.rel (%p473) target = $region16
        $region15: #{simple_mlp_gelu.1} parent=11 // pred_region
          _
        $region16: #{simple_mlp_gelu.1} parent=11 // pred_fallthru
          _
        // Predicated region
        $region17: #{simple_mlp_gelu.1} parent=11 // pred_check
          %p476 = pneg %p96
        $region18: #{simple_mlp_gelu.1} parent=11 // pred_check_branch
          %478 = sbr.rel (%p476) target = $region20
        $region19: #{simple_mlp_gelu.1} parent=11 // pred_region
          _
        $region20: #{simple_mlp_gelu.1} parent=11 // pred_fallthru
          _
        // Predicated region
        $region21: #{simple_mlp_gelu.1} parent=11 // pred_check
          %p479 = pneg %p117
        $region22: #{simple_mlp_gelu.1} parent=11 // pred_check_branch
          %481 = sbr.rel (%p479) target = $region24
        $region23: #{simple_mlp_gelu.1} parent=11 // pred_region
          _
        $region24: #{simple_mlp_gelu.1} parent=11 // pred_fallthru
          _
        // Predicated region
        $region25: #{simple_mlp_gelu.1} parent=11 // pred_check
          %p482 = pneg %p138
        $region26: #{simple_mlp_gelu.1} parent=11 // pred_check_branch
          %484 = sbr.rel (%p482) target = $region28
        $region27: #{simple_mlp_gelu.1} parent=11 // pred_region
          _
        $region28: #{simple_mlp_gelu.1} parent=11 // pred_fallthru
          _
        // Predicated region
        $region29: #{simple_mlp_gelu.1} parent=11 // pred_check
          %p485 = pneg %p159
        $region30: #{simple_mlp_gelu.1} parent=11 // pred_check_branch
          %487 = sbr.rel (%p485) target = $region32
        $region31: #{simple_mlp_gelu.1} parent=11 // pred_region
          _
        $region32: #{simple_mlp_gelu.1} parent=11 // pred_fallthru
          _
        // Predicated region
        $region33: #{simple_mlp_gelu.1} parent=11 // pred_check
          %p488 = pneg %p180
        $region34: #{simple_mlp_gelu.1} parent=11 // pred_check_branch
          %490 = sbr.rel (%p488) target = $region36
        $region35: #{simple_mlp_gelu.1} parent=11 // pred_region
          _
        $region36: #{simple_mlp_gelu.1} parent=11 // pred_fallthru
          _
        // Predicated region
        $region37: #{simple_mlp_gelu.1} parent=11 // pred_check
          %p491 = pneg %p201
        $region38: #{simple_mlp_gelu.1} parent=11 // pred_check_branch
          %493 = sbr.rel (%p491) target = $region40
        $region39: #{simple_mlp_gelu.1} parent=11 // pred_region
          _
        $region40: #{simple_mlp_gelu.1} parent=11 // pred_fallthru
          _
        // Predicated region
        $region41: #{simple_mlp_gelu.1} parent=11 // pred_check
          %p494 = pneg %p222
        $region42: #{simple_mlp_gelu.1} parent=11 // pred_check_branch
          %496 = sbr.rel (%p494) target = $region44
        $region43: #{simple_mlp_gelu.1} parent=11 // pred_region
          _
        $region44: #{simple_mlp_gelu.1} parent=11 // pred_fallthru
          _
        // Predicated region
        $region45: #{simple_mlp_gelu.1} parent=11 // pred_check
          %p497 = pneg %p243
        $region46: #{simple_mlp_gelu.1} parent=11 // pred_check_branch
          %499 = sbr.rel (%p497) target = $region48
        $region47: #{simple_mlp_gelu.1} parent=11 // pred_region
          _
        $region48: #{simple_mlp_gelu.1} parent=11 // pred_fallthru
          _
        // Predicated region
        $region49: #{simple_mlp_gelu.1} parent=11 // pred_check
          %p500 = pneg %p264
        $region50: #{simple_mlp_gelu.1} parent=11 // pred_check_branch
          %502 = sbr.rel (%p500) target = $region52
        $region51: #{simple_mlp_gelu.1} parent=11 // pred_region
          _
        $region52: #{simple_mlp_gelu.1} parent=11 // pred_fallthru
          _
        // Predicated region
        $region53: #{simple_mlp_gelu.1} parent=11 // pred_check
          %p503 = pneg %p285
        $region54: #{simple_mlp_gelu.1} parent=11 // pred_check_branch
          %505 = sbr.rel (%p503) target = $region56
        $region55: #{simple_mlp_gelu.1} parent=11 // pred_region
          _
        $region56: #{simple_mlp_gelu.1} parent=11 // pred_fallthru
          _
        // Predicated region
        $region57: #{simple_mlp_gelu.1} parent=11 // pred_check
          %p506 = pneg %p306
        $region58: #{simple_mlp_gelu.1} parent=11 // pred_check_branch
          %508 = sbr.rel (%p506) target = $region60
        $region59: #{simple_mlp_gelu.1} parent=11 // pred_region
          _
        $region60: #{simple_mlp_gelu.1} parent=11 // pred_fallthru
          _
        // Predicated region
        $region61: #{simple_mlp_gelu.1} parent=11 // pred_check
          %p509 = pneg %p327
        $region62: #{simple_mlp_gelu.1} parent=11 // pred_check_branch
          %511 = sbr.rel (%p509) target = $region64
        $region63: #{simple_mlp_gelu.1} parent=11 // pred_region
          _
        $region64: #{simple_mlp_gelu.1} parent=11 // pred_fallthru
          _
        // Predicated region
        $region65: #{simple_mlp_gelu.1} parent=11 // pred_check
          %p512 = pneg %p348
        $region66: #{simple_mlp_gelu.1} parent=11 // pred_check_branch
          %514 = sbr.rel (%p512) target = $region68
        $region67: #{simple_mlp_gelu.1} parent=11 // pred_region
          _
        $region68: #{simple_mlp_gelu.1} parent=11 // pred_fallthru
          _
        // Predicated region
        $region69: #{simple_mlp_gelu.1} parent=11 // pred_check
          %p515 = pneg %p369
        $region70: #{simple_mlp_gelu.1} parent=11 // pred_check_branch
          %517 = sbr.rel (%p515) target = $region72
        $region71: #{simple_mlp_gelu.1} parent=11 // pred_region
          _
        $region72: #{simple_mlp_gelu.1} parent=11 // pred_fallthru
          _
        // Predicated region
        $region73: #{simple_mlp_gelu.1} parent=11 // pred_check
          %p518 = pneg %p390
        $region74: #{simple_mlp_gelu.1} parent=11 // pred_check_branch
          %520 = sbr.rel (%p518) target = $region76
        $region75: #{simple_mlp_gelu.1} parent=11 // pred_region
          _
        $region76: #{simple_mlp_gelu.1} parent=11 // pred_fallthru
          _
        // Predicated region
        $region77: #{simple_mlp_gelu.1} parent=11 // pred_check
          %p521 = pneg %p411
        $region78: #{simple_mlp_gelu.1} parent=11 // pred_check_branch
          %523 = sbr.rel (%p521) target = $region80
        $region79: #{simple_mlp_gelu.1} parent=11 // pred_region
          _
        $region80: #{simple_mlp_gelu.1} parent=11 // pred_fallthru
          _
        // Predicated region
        $region81: #{simple_mlp_gelu.1} parent=11 // pred_check
          %p524 = pneg %p432
        $region82: #{simple_mlp_gelu.1} parent=11 // pred_check_branch
          %526 = sbr.rel (%p524) target = $region84
        $region83: #{simple_mlp_gelu.1} parent=11 // pred_region
          _
        $region84: #{simple_mlp_gelu.1} parent=11 // pred_fallthru
          _
      $region12: #{simple_mlp_gelu.1} parent=5 // pred_fallthru
        _
      %p527 = scmp.lt.s32.totalorder %s28, 2
      // Predicated region
      $region85: #{simple_mlp_gelu.1} parent=5 // pred_check
        %p528 = pneg %p527
      $region86: #{simple_mlp_gelu.1} parent=5 // pred_check_branch
        %530 = sbr.rel (%p528) target = $region88
      $region87: #{simple_mlp_gelu.1} parent=5 // pred_region
        // Predicated region
        $region89: #{simple_mlp_gelu.1} parent=87 // pred_check
          %p531 = pneg %p48
        $region90: #{simple_mlp_gelu.1} parent=87 // pred_check_branch
          %533 = sbr.rel (%p531) target = $region92
        $region91: #{simple_mlp_gelu.1} parent=87 // pred_region
          %p534 = scmp.lt.s32.totalorder %s28, 1
          %s535 = scalar_select %p534, %s28, 1
          %s536 = smul.addr %s535, 7
          %s537 = smul.addr %s536, 8
          %s538 = scalar_lea.vmem %s0, %s537
        $region92: #{simple_mlp_gelu.1} parent=87 // pred_fallthru
          _
      $region88: #{simple_mlp_gelu.1} parent=5 // pred_fallthru
        _
      %p539 = scmp.le.s32.totalorder 1, %s28
      %p540 = scmp.lt.s32.totalorder %s28, 3
      %p541 = pnand %p539, %p540
      %p542 = pneg %p541
      // Predicated region
      $region93: #{simple_mlp_gelu.1} parent=5 // pred_check
        _
      $region94: #{simple_mlp_gelu.1} parent=5 // pred_check_branch
        %544 = sbr.rel (%p541) target = $region96
      $region95: #{simple_mlp_gelu.1} parent=5 // pred_region
        %s545 = ssub.s32 %s28, 1
        %p546 = scmp.lt.s32.totalorder %s33, 1
        %s547 = scalar_select %p546, %s33, 1
        %s548 = smul.addr %s547, 7
        %s549 = smul.addr %s548, 8
        %s550 = scalar_lea.vmem %s0, %s549
        %p551 = pneg %p54
        %p552 = pneg %p51
        %p553 = pneg %p75
        %p554 = pneg %p72
        %p555 = pneg %p96
        %p556 = pneg %p93
        %p557 = pneg %p117
        %p558 = pneg %p114
        %p559 = pneg %p138
        %p560 = pneg %p135
        %p561 = pneg %p159
        %p562 = pneg %p156
        %p563 = pneg %p180
        %p564 = pneg %p177
        %p565 = pneg %p201
        %p566 = pneg %p198
        %p567 = pneg %p222
        %p568 = pneg %p219
        %p569 = pneg %p243
        %p570 = pneg %p240
        %p571 = pneg %p264
        %p572 = pneg %p261
        %p573 = pneg %p285
        %p574 = pneg %p282
        %p575 = pneg %p306
        %p576 = pneg %p303
        %p577 = pneg %p327
        %p578 = pneg %p324
        %p579 = pneg %p348
        %p580 = pneg %p345
        %p581 = pneg %p369
        %p582 = pneg %p366
        %p583 = pneg %p390
        %p584 = pneg %p387
        %p585 = pneg %p411
        %p586 = pneg %p408
        %p587 = pneg %p432
        %p588 = pneg %p429
        %p589 = pneg %p458
        %p590 = pneg %p455
        %s591 = sand.u32 %s445, 1
        %s592 = scalar_lea.sflag [#allocation3], %s591
        %s593 = sand.u32 %s445, 1
        %s594 = smul.addr %s593, 8
        %s595 = scalar_lea.vmem [#allocation2], %s594
        %p596 = scmp.lt.s32.totalorder %s33, 1
        %s597 = scalar_select %p596, %s33, 1
        %s598 = smul.addr %s597, 7
        %s599 = smul.addr %s598, 8
        %s600 = scalar_lea.vmem %s0, %s599
        %v602 = vld [vmem:[%s600] sm:$0xff]
        %v603 = vld [vmem:[%s600 + $0x8] sm:$0xff]
        %v604 = vld [vmem:[%s600 + $0x10] sm:$0xff]
        %v605 = vld [vmem:[%s600 + $0x18] sm:$0xff]
        %v606 = vld [vmem:[%s600 + $0x20] sm:$0xff]
        %v607 = vld [vmem:[%s600 + $0x28] sm:$0xff]
        %v608 = vld [vmem:[%s600 + $0x30] sm:$0xff]
        %v609 = vpack.c.bf16 %v602, %v602
        %v610 = vpack.c.bf16 %v603, %v603
        %v611 = vpack.c.bf16 %v604, %v604
        %v612 = vpack.c.bf16 %v605, %v605
        %v613 = vpack.c.bf16 %v606, %v606
        %v614 = vpack.c.bf16 %v607, %v607
        %v615 = vpack.c.bf16 %v608, %v608
        %v616 = vld [vmem:[%s1] sm:$0xf]
        %v617 = vld [vmem:[%s1 + $0x4] sm:$0xf]
        %v618 = vld [vmem:[%s1 + $0x8] sm:$0xf]
        %v619 = vld [vmem:[%s1 + $0xc] sm:$0xf]
        %v620 = vld [vmem:[%s1 + $0x10] sm:$0xf]
        %v621 = vld [vmem:[%s1 + $0x14] sm:$0xf]
        %v622 = vld [vmem:[%s1 + $0x18] sm:$0xf]
        %v623 = vld [vmem:[%s1 + $0x1c] sm:$0xf]
        %v624 = vld [vmem:[%s1 + $0x20] sm:$0xf]
        %v625 = vld [vmem:[%s1 + $0x24] sm:$0xf]
        %v626 = vld [vmem:[%s1 + $0x28] sm:$0xf]
        %v627 = vld [vmem:[%s1 + $0x2c] sm:$0xf]
        %v628 = vld [vmem:[%s1 + $0x30] sm:$0xf]
        %v629 = vld [vmem:[%s1 + $0x34] sm:$0xf]
        %v630 = vld [vmem:[%s1 + $0x38] sm:$0xf]
        %v631 = vld [vmem:[%s1 + $0x3c] sm:$0xf]
        %v632 = vld [vmem:[%s1 + $0x40] sm:$0xf]
        %v633 = vld [vmem:[%s1 + $0x44] sm:$0xf]
        %v634 = vld [vmem:[%s1 + $0x48] sm:$0xf]
        %v635 = vld [vmem:[%s1 + $0x4c] sm:$0xf]
        %v636 = vld [vmem:[%s1 + $0x50] sm:$0xf]
        %v637 = vld [vmem:[%s1 + $0x54] sm:$0xf]
        %v638 = vld [vmem:[%s1 + $0x58] sm:$0xf]
        %v639 = vld [vmem:[%s1 + $0x5c] sm:$0xf]
        %v640 = vld [vmem:[%s1 + $0x60] sm:$0xf]
        %v641 = vld [vmem:[%s1 + $0x64] sm:$0xf]
        %v642 = vld [vmem:[%s1 + $0x68] sm:$0xf]
        %v643 = vld [vmem:[%s1 + $0x6c] sm:$0xf]
        %v644 = vld [vmem:[%s1 + $0x70] sm:$0xf]
        %v645 = vld [vmem:[%s1 + $0x74] sm:$0xf]
        %v646 = vld [vmem:[%s1 + $0x78] sm:$0xf]
        %v647 = vld [vmem:[%s1 + $0x7c] sm:$0xf]
        %v648 = vld [vmem:[%s1 + $0x80] sm:$0xf]
        %v649 = vld [vmem:[%s1 + $0x84] sm:$0xf]
        %v650 = vld [vmem:[%s1 + $0x88] sm:$0xf]
        %v651 = vld [vmem:[%s1 + $0x8c] sm:$0xf]
        %v652 = vld [vmem:[%s1 + $0x90] sm:$0xf]
        %v653 = vld [vmem:[%s1 + $0x94] sm:$0xf]
        %v654 = vld [vmem:[%s1 + $0x98] sm:$0xf]
        %v655 = vld [vmem:[%s1 + $0x9c] sm:$0xf]
        %v656 = vld [vmem:[%s1 + $0xa0] sm:$0xf]
        %v657 = vld [vmem:[%s1 + $0xa4] sm:$0xf]
        %v658 = vld [vmem:[%s1 + $0xa8] sm:$0xf]
        %v659 = vld [vmem:[%s1 + $0xac] sm:$0xf]
        %v660 = vld [vmem:[%s1 + $0xb0] sm:$0xf]
        %v661 = vld [vmem:[%s1 + $0xb4] sm:$0xf]
        %v662 = vld [vmem:[%s1 + $0xb8] sm:$0xf]
        %v663 = vld [vmem:[%s1 + $0xbc] sm:$0xf]
        %v664 = vld [vmem:[%s1 + $0xc0] sm:$0xf]
        %v665 = vld [vmem:[%s1 + $0xc4] sm:$0xf]
        %v666 = vld [vmem:[%s1 + $0xc8] sm:$0xf]
        %v667 = vld [vmem:[%s1 + $0xcc] sm:$0xf]
        %v668 = vld [vmem:[%s1 + $0xd0] sm:$0xf]
        %v669 = vld [vmem:[%s1 + $0xd4] sm:$0xf]
        %v670 = vld [vmem:[%s1 + $0xd8] sm:$0xf]
        %v671 = vld [vmem:[%s1 + $0xdc] sm:$0xf]
        %v672 = vld [vmem:[%s1 + $0xe0] sm:$0xf]
        %v673 = vld [vmem:[%s1 + $0xe4] sm:$0xf]
        %v674 = vld [vmem:[%s1 + $0xe8] sm:$0xf]
        %v675 = vld [vmem:[%s1 + $0xec] sm:$0xf]
        %v676 = vld [vmem:[%s1 + $0xf0] sm:$0xf]
        %v677 = vld [vmem:[%s1 + $0xf4] sm:$0xf]
        %v678 = vld [vmem:[%s1 + $0xf8] sm:$0xf]
        %v679 = vld [vmem:[%s1 + $0xfc] sm:$0xf]
        %v680 = vld [vmem:[%s1 + $0x100] sm:$0xf]
        %v681 = vld [vmem:[%s1 + $0x104] sm:$0xf]
        %v682 = vld [vmem:[%s1 + $0x108] sm:$0xf]
        %v683 = vld [vmem:[%s1 + $0x10c] sm:$0xf]
        %v684 = vld [vmem:[%s1 + $0x110] sm:$0xf]
        %v685 = vld [vmem:[%s1 + $0x114] sm:$0xf]
        %v686 = vld [vmem:[%s1 + $0x118] sm:$0xf]
        %v687 = vld [vmem:[%s1 + $0x11c] sm:$0xf]
        %v688 = vld [vmem:[%s1 + $0x120] sm:$0xf]
        %v689 = vld [vmem:[%s1 + $0x124] sm:$0xf]
        %v690 = vld [vmem:[%s1 + $0x128] sm:$0xf]
        %v691 = vld [vmem:[%s1 + $0x12c] sm:$0xf]
        %v692 = vld [vmem:[%s1 + $0x130] sm:$0xf]
        %v693 = vld [vmem:[%s1 + $0x134] sm:$0xf]
        %v694 = vld [vmem:[%s1 + $0x138] sm:$0xf]
        %v695 = vld [vmem:[%s1 + $0x13c] sm:$0xf]
        %v696 = vld [vmem:[%s1 + $0x140] sm:$0xf]
        %v697 = vld [vmem:[%s1 + $0x144] sm:$0xf]
        %v698 = vld [vmem:[%s1 + $0x148] sm:$0xf]
        %v699 = vld [vmem:[%s1 + $0x14c] sm:$0xf]
        %v700 = vld [vmem:[%s1 + $0x150] sm:$0xf]
        %v701 = vld [vmem:[%s1 + $0x154] sm:$0xf]
        %v702 = vld [vmem:[%s1 + $0x158] sm:$0xf]
        %v703 = vld [vmem:[%s1 + $0x15c] sm:$0xf]
        %v704 = vld [vmem:[%s1 + $0x160] sm:$0xf]
        %v705 = vld [vmem:[%s1 + $0x164] sm:$0xf]
        %v706 = vld [vmem:[%s1 + $0x168] sm:$0xf]
        %v707 = vld [vmem:[%s1 + $0x16c] sm:$0xf]
        %v708 = vld [vmem:[%s1 + $0x170] sm:$0xf]
        %v709 = vld [vmem:[%s1 + $0x174] sm:$0xf]
        %v710 = vld [vmem:[%s1 + $0x178] sm:$0xf]
        %v711 = vld [vmem:[%s1 + $0x17c] sm:$0xf]
        %v712 = vld [vmem:[%s1 + $0x180] sm:$0xf]
        %v713 = vld [vmem:[%s1 + $0x184] sm:$0xf]
        %v714 = vld [vmem:[%s2] sm:$0x1]
        %v716 = vlaneseq
        %v717 = vshrl.u32 %v716, 7
        %v718 = vsub.s32 0, %v717
        %v719 = vrot.slane %v714, %v718
        %v819 = vunpack.c.l.b16 %v616
        %v820 = vunpack.c.l.b16 %v617
        %v821 = vunpack.c.l.b16 %v618
        %v822 = vunpack.c.l.b16 %v619
        %v823 = vunpack.c.l.b16 %v620
        %v824 = vunpack.c.l.b16 %v621
        %v825 = vunpack.c.l.b16 %v622
        %v826 = vunpack.c.l.b16 %v623
        %v827 = vunpack.c.l.b16 %v624
        %v828 = vunpack.c.l.b16 %v625
        %v829 = vunpack.c.l.b16 %v626
        %v830 = vunpack.c.l.b16 %v627
        %v831 = vunpack.c.l.b16 %v628
        %v832 = vunpack.c.l.b16 %v629
        %v833 = vunpack.c.l.b16 %v630
        %v834 = vunpack.c.l.b16 %v631
        %v835 = vunpack.c.l.b16 %v632
        %v836 = vunpack.c.l.b16 %v633
        %v837 = vunpack.c.l.b16 %v634
        %v838 = vunpack.c.l.b16 %v635
        %v839 = vunpack.c.l.b16 %v636
        %v840 = vunpack.c.l.b16 %v637
        %v841 = vunpack.c.l.b16 %v638
        %v842 = vunpack.c.l.b16 %v639
        %v843 = vunpack.c.l.b16 %v640
        %v844 = vunpack.c.l.b16 %v641
        %v845 = vunpack.c.l.b16 %v642
        %v846 = vunpack.c.l.b16 %v643
        %v847 = vunpack.c.l.b16 %v644
        %v848 = vunpack.c.l.b16 %v645
        %v849 = vunpack.c.l.b16 %v646
        %v850 = vunpack.c.l.b16 %v647
        %v851 = vunpack.c.l.b16 %v648
        %v852 = vunpack.c.l.b16 %v649
        %v853 = vunpack.c.l.b16 %v650
        %v854 = vunpack.c.l.b16 %v651
        %v855 = vunpack.c.l.b16 %v652
        %v856 = vunpack.c.l.b16 %v653
        %v857 = vunpack.c.l.b16 %v654
        %v858 = vunpack.c.l.b16 %v655
        %v859 = vunpack.c.l.b16 %v656
        %v860 = vunpack.c.l.b16 %v657
        %v861 = vunpack.c.l.b16 %v658
        %v862 = vunpack.c.l.b16 %v659
        %v863 = vunpack.c.l.b16 %v660
        %v864 = vunpack.c.l.b16 %v661
        %v865 = vunpack.c.l.b16 %v662
        %v866 = vunpack.c.l.b16 %v663
        %v867 = vunpack.c.l.b16 %v664
        %v868 = vunpack.c.l.b16 %v665
        %v869 = vunpack.c.l.b16 %v666
        %v870 = vunpack.c.l.b16 %v667
        %v871 = vunpack.c.l.b16 %v668
        %v872 = vunpack.c.l.b16 %v669
        %v873 = vunpack.c.l.b16 %v670
        %v874 = vunpack.c.l.b16 %v671
        %v875 = vunpack.c.l.b16 %v672
        %v876 = vunpack.c.l.b16 %v673
        %v877 = vunpack.c.l.b16 %v674
        %v878 = vunpack.c.l.b16 %v675
        %v879 = vunpack.c.l.b16 %v676
        %v880 = vunpack.c.l.b16 %v677
        %v881 = vunpack.c.l.b16 %v678
        %v882 = vunpack.c.l.b16 %v679
        %v883 = vunpack.c.l.b16 %v680
        %v884 = vunpack.c.l.b16 %v681
        %v885 = vunpack.c.l.b16 %v682
        %v886 = vunpack.c.l.b16 %v683
        %v887 = vunpack.c.l.b16 %v684
        %v888 = vunpack.c.l.b16 %v685
        %v889 = vunpack.c.l.b16 %v686
        %v890 = vunpack.c.l.b16 %v687
        %v891 = vunpack.c.l.b16 %v688
        %v892 = vunpack.c.l.b16 %v689
        %v893 = vunpack.c.l.b16 %v690
        %v894 = vunpack.c.l.b16 %v691
        %v895 = vunpack.c.l.b16 %v692
        %v896 = vunpack.c.l.b16 %v693
        %v897 = vunpack.c.l.b16 %v694
        %v898 = vunpack.c.l.b16 %v695
        %v899 = vunpack.c.l.b16 %v696
        %v900 = vunpack.c.l.b16 %v697
        %v901 = vunpack.c.l.b16 %v698
        %v902 = vunpack.c.l.b16 %v699
        %v903 = vunpack.c.l.b16 %v700
        %v904 = vunpack.c.l.b16 %v701
        %v905 = vunpack.c.l.b16 %v702
        %v906 = vunpack.c.l.b16 %v703
        %v907 = vunpack.c.l.b16 %v704
        %v908 = vunpack.c.l.b16 %v705
        %v909 = vunpack.c.l.b16 %v706
        %v910 = vunpack.c.l.b16 %v707
        %v911 = vunpack.c.l.b16 %v708
        %v912 = vunpack.c.l.b16 %v709
        %v913 = vunpack.c.l.b16 %v710
        %v914 = vunpack.c.l.b16 %v711
        %v915 = vunpack.c.l.b16 %v712
        %v916 = vunpack.c.l.b16 %v713
        %v917 = vpack.c.b16 %v820, %v819
        %v918 = vpack.c.b16 %v822, %v821
        %v919 = vpack.c.b16 %v824, %v823
        %v920 = vpack.c.b16 %v826, %v825
        %v921 = vpack.c.b16 %v828, %v827
        %v922 = vpack.c.b16 %v830, %v829
        %v923 = vpack.c.b16 %v832, %v831
        %v924 = vpack.c.b16 %v834, %v833
        %v925 = vpack.c.b16 %v836, %v835
        %v926 = vpack.c.b16 %v838, %v837
        %v927 = vpack.c.b16 %v840, %v839
        %v928 = vpack.c.b16 %v842, %v841
        %v929 = vpack.c.b16 %v844, %v843
        %v930 = vpack.c.b16 %v846, %v845
        %v931 = vpack.c.b16 %v848, %v847
        %v932 = vpack.c.b16 %v850, %v849
        %v933 = vpack.c.b16 %v852, %v851
        %v934 = vpack.c.b16 %v854, %v853
        %v935 = vpack.c.b16 %v856, %v855
        %v936 = vpack.c.b16 %v858, %v857
        %v937 = vpack.c.b16 %v860, %v859
        %v938 = vpack.c.b16 %v862, %v861
        %v939 = vpack.c.b16 %v864, %v863
        %v940 = vpack.c.b16 %v866, %v865
        %v941 = vpack.c.b16 %v868, %v867
        %v942 = vpack.c.b16 %v870, %v869
        %v943 = vpack.c.b16 %v872, %v871
        %v944 = vpack.c.b16 %v874, %v873
        %v945 = vpack.c.b16 %v876, %v875
        %v946 = vpack.c.b16 %v878, %v877
        %v947 = vpack.c.b16 %v880, %v879
        %v948 = vpack.c.b16 %v882, %v881
        %v949 = vpack.c.b16 %v884, %v883
        %v950 = vpack.c.b16 %v886, %v885
        %v951 = vpack.c.b16 %v888, %v887
        %v952 = vpack.c.b16 %v890, %v889
        %v953 = vpack.c.b16 %v892, %v891
        %v954 = vpack.c.b16 %v894, %v893
        %v955 = vpack.c.b16 %v896, %v895
        %v956 = vpack.c.b16 %v898, %v897
        %v957 = vpack.c.b16 %v900, %v899
        %v958 = vpack.c.b16 %v902, %v901
        %v959 = vpack.c.b16 %v904, %v903
        %v960 = vpack.c.b16 %v906, %v905
        %v961 = vpack.c.b16 %v908, %v907
        %v962 = vpack.c.b16 %v910, %v909
        %v963 = vpack.c.b16 %v912, %v911
        %v964 = vpack.c.b16 %v914, %v913
        %v965 = vpack.c.b16 %v916, %v915
        %vm1015 = vcmask 130048
        %v1017 = vsel %vm1015, %v615, 0
        %1019 = vmatprep.subr.bf16.mxu0 0
        %1020 = vmatpush1.bf16.msra.mxu0 %v917
        %1021 = vmatprep.subr.bf16.mxu0 0
        %1022 = vmatpush1.bf16.msra.mxu0 %v918
        %1023 = vmatprep.subr.bf16.mxu0 0
        %1024 = vmatpush1.bf16.msra.mxu0 %v919
        %1025 = vmatprep.subr.bf16.mxu0 0
        %1026 = vmatpush1.bf16.msra.mxu0 %v920
        %1027 = vmatprep.subr.bf16.mxu0 0
        %1028 = vmatpush1.bf16.msra.mxu0 %v921
        %1029 = vmatprep.subr.bf16.mxu0 0
        %1030 = vmatpush1.bf16.msra.mxu0 %v922
        %1031 = vmatprep.subr.bf16.mxu0 0
        %1032 = vmatpush1.bf16.msra.mxu0 %v923
        %1033 = vmatprep.subr.bf16.mxu0 0
        %1034 = vmatpush1.bf16.msra.mxu0 %v924
        %1035 = vmatprep.subr.bf16.mxu0 0
        %1036 = vmatpush1.bf16.msra.mxu0 %v925
        %1037 = vmatprep.subr.bf16.mxu0 0
        %1038 = vmatpush1.bf16.msra.mxu0 %v926
        %1039 = vmatprep.subr.bf16.mxu0 0
        %1040 = vmatpush1.bf16.msra.mxu0 %v927
        %1041 = vmatprep.subr.bf16.mxu0 0
        %1042 = vmatpush1.bf16.msra.mxu0 %v928
        %1043 = vmatprep.subr.bf16.mxu0 0
        %1044 = vmatpush1.bf16.msra.mxu0 %v929
        %1045 = vmatprep.subr.bf16.mxu0 0
        %1046 = vmatpush1.bf16.msra.mxu0 %v930
        %1047 = vmatprep.subr.bf16.mxu0 0
        %1048 = vmatpush1.bf16.msra.mxu0 %v931
        %1049 = vmatprep.subr.bf16.mxu0 0
        %1050 = vmatpush1.bf16.msra.mxu0 %v932
        %1051 = vmatprep.mubr.bf16.mxu0 %v610
        %1052 = vmatmul.mubr.bf16.gmra.mrb[0].mxu0 %v609
        %v1053 = vpop.f32.mrb[0].mxu0
        %v1054 = vadd.f32 %v719, %v1053
        %v1055 = vpop.f32.mrb[0].mxu0
        %v1056 = vpop.f32.mrb[0].mxu0
        %v1057 = vpop.f32.mrb[0].mxu0
        %1058 = vdwg.mxu0
        %1059 = vmatprep.subr.bf16.mxu0 0
        %1060 = vmatpush1.bf16.msra.mxu0 %v933
        %1061 = vmatprep.subr.bf16.mxu0 0
        %1062 = vmatpush1.bf16.msra.mxu0 %v934
        %1063 = vmatprep.subr.bf16.mxu0 0
        %1064 = vmatpush1.bf16.msra.mxu0 %v935
        %1065 = vmatprep.subr.bf16.mxu0 0
        %1066 = vmatpush1.bf16.msra.mxu0 %v936
        %1067 = vmatprep.subr.bf16.mxu0 0
        %1068 = vmatpush1.bf16.msra.mxu0 %v937
        %1069 = vmatprep.subr.bf16.mxu0 0
        %1070 = vmatpush1.bf16.msra.mxu0 %v938
        %1071 = vmatprep.subr.bf16.mxu0 0
        %1072 = vmatpush1.bf16.msra.mxu0 %v939
        %1073 = vmatprep.subr.bf16.mxu0 0
        %1074 = vmatpush1.bf16.msra.mxu0 %v940
        %1075 = vmatprep.subr.bf16.mxu0 0
        %1076 = vmatpush1.bf16.msra.mxu0 %v941
        %1077 = vmatprep.subr.bf16.mxu0 0
        %1078 = vmatpush1.bf16.msra.mxu0 %v942
        %1079 = vmatprep.subr.bf16.mxu0 0
        %1080 = vmatpush1.bf16.msra.mxu0 %v943
        %1081 = vmatprep.subr.bf16.mxu0 0
        %1082 = vmatpush1.bf16.msra.mxu0 %v944
        %1083 = vmatprep.subr.bf16.mxu0 0
        %1084 = vmatpush1.bf16.msra.mxu0 %v945
        %1085 = vmatprep.subr.bf16.mxu0 0
        %1086 = vmatpush1.bf16.msra.mxu0 %v946
        %1087 = vmatprep.subr.bf16.mxu0 0
        %1088 = vmatpush1.bf16.msra.mxu0 %v947
        %1089 = vmatprep.subr.bf16.mxu0 0
        %1090 = vmatpush1.bf16.msra.mxu0 %v948
        %1091 = vmatprep.mubr.bf16.mxu0 %v612
        %1092 = vmatmul.mubr.bf16.gmra.mrb[0].mxu0 %v611
        %v1093 = vpop.f32.mrb[0].mxu0
        %v1094 = vadd.f32 %v1054, %v1093
        %v1095 = vpop.f32.mrb[0].mxu0
        %v1096 = vpop.f32.mrb[0].mxu0
        %v1097 = vpop.f32.mrb[0].mxu0
        %1098 = vdwg.mxu0
        %1099 = vmatprep.subr.bf16.mxu0 0
        %1100 = vmatpush1.bf16.msra.mxu0 %v949
        %1101 = vmatprep.subr.bf16.mxu0 0
        %1102 = vmatpush1.bf16.msra.mxu0 %v950
        %1103 = vmatprep.subr.bf16.mxu0 0
        %1104 = vmatpush1.bf16.msra.mxu0 %v951
        %1105 = vmatprep.subr.bf16.mxu0 0
        %1106 = vmatpush1.bf16.msra.mxu0 %v952
        %1107 = vmatprep.subr.bf16.mxu0 0
        %1108 = vmatpush1.bf16.msra.mxu0 %v953
        %1109 = vmatprep.subr.bf16.mxu0 0
        %1110 = vmatpush1.bf16.msra.mxu0 %v954
        %1111 = vmatprep.subr.bf16.mxu0 0
        %1112 = vmatpush1.bf16.msra.mxu0 %v955
        %1113 = vmatprep.subr.bf16.mxu0 0
        %1114 = vmatpush1.bf16.msra.mxu0 %v956
        %1115 = vmatprep.subr.bf16.mxu0 0
        %1116 = vmatpush1.bf16.msra.mxu0 %v957
        %1117 = vmatprep.subr.bf16.mxu0 0
        %1118 = vmatpush1.bf16.msra.mxu0 %v958
        %1119 = vmatprep.subr.bf16.mxu0 0
        %1120 = vmatpush1.bf16.msra.mxu0 %v959
        %1121 = vmatprep.subr.bf16.mxu0 0
        %1122 = vmatpush1.bf16.msra.mxu0 %v960
        %1123 = vmatprep.subr.bf16.mxu0 0
        %1124 = vmatpush1.bf16.msra.mxu0 %v961
        %1125 = vmatprep.subr.bf16.mxu0 0
        %1126 = vmatpush1.bf16.msra.mxu0 %v962
        %1127 = vmatprep.subr.bf16.mxu0 0
        %1128 = vmatpush1.bf16.msra.mxu0 %v963
        %1129 = vmatprep.subr.bf16.mxu0 0
        %1130 = vmatpush1.bf16.msra.mxu0 %v964
        %1131 = vmatprep.mubr.bf16.mxu0 %v614
        %1132 = vmatmul.mubr.bf16.gmra.mrb[0].mxu0 %v613
        %v1133 = vpop.f32.mrb[0].mxu0
        %v1134 = vadd.f32 %v1094, %v1133
        %v1135 = vpop.f32.mrb[0].mxu0
        %v1136 = vpop.f32.mrb[0].mxu0
        %v1137 = vpop.f32.mrb[0].mxu0
        %1138 = vdwg.mxu0
        %1139 = vmatprep.subr.bf16.mxu0 0
        %1140 = vmatpush1.bf16.msra.mxu0 %v965
        %1141 = vmatprep.subr.bf16.mxu0 0
        %1142 = vmatpush1.bf16.msra.mxu0 0
        %1143 = vmatprep.subr.bf16.mxu0 0
        %1144 = vmatpush1.bf16.msra.mxu0 0
        %1145 = vmatprep.subr.bf16.mxu0 0
        %1146 = vmatpush1.bf16.msra.mxu0 0
        %1147 = vmatprep.subr.bf16.mxu0 0
        %1148 = vmatpush1.bf16.msra.mxu0 0
        %1149 = vmatprep.subr.bf16.mxu0 0
        %1150 = vmatpush1.bf16.msra.mxu0 0
        %1151 = vmatprep.subr.bf16.mxu0 0
        %1152 = vmatpush1.bf16.msra.mxu0 0
        %1153 = vmatprep.subr.bf16.mxu0 0
        %1154 = vmatpush1.bf16.msra.mxu0 0
        %1155 = vmatprep.subr.bf16.mxu0 0
        %1156 = vmatpush1.bf16.msra.mxu0 0
        %1157 = vmatprep.subr.bf16.mxu0 0
        %1158 = vmatpush1.bf16.msra.mxu0 0
        %1159 = vmatprep.subr.bf16.mxu0 0
        %1160 = vmatpush1.bf16.msra.mxu0 0
        %1161 = vmatprep.subr.bf16.mxu0 0
        %1162 = vmatpush1.bf16.msra.mxu0 0
        %1163 = vmatprep.subr.bf16.mxu0 0
        %1164 = vmatpush1.bf16.msra.mxu0 0
        %1165 = vmatprep.subr.bf16.mxu0 0
        %1166 = vmatpush1.bf16.msra.mxu0 0
        %1167 = vmatprep.subr.bf16.mxu0 0
        %1168 = vmatpush1.bf16.msra.mxu0 0
        %1169 = vmatprep.subr.bf16.mxu0 0
        %1170 = vmatpush1.bf16.msra.mxu0 0
        %1171 = vmatprep.mubr.bf16.mxu0 0
        %1172 = vmatmul.mubr.bf16.gmra.mrb[0].mxu0 %v1017
        %v1173 = vpop.f32.mrb[0].mxu0
        %v1174 = vadd.f32 %v1134, %v1173
        %v1175 = vpop.f32.mrb[0].mxu0
        %v1176 = vpop.f32.mrb[0].mxu0
        %v1177 = vpop.f32.mrb[0].mxu0
        %1178 = vdwg.mxu0
        %v1179 = vmul.f32 %v1174, %v1174
        %v1180 = vmul.f32 %v1174, %v1179
        %v1181 = vmul.f32 %v1180, 0.044715
        %v1182 = vadd.f32 %v1174, %v1181
        %v1183 = vmul.f32 %v1182, 0.7978846
        %v1184 = vtanh.pop %v1183
        %v1185 = vadd.f32 %v1184, 1.0
        %v1186 = vmul.f32 %v1185, 0.5
        %v1187 = vmul.f32 %v1174, %v1186
        %v1188 = vpack.c.bf16 %v1187, %v1187
        %v1189 = vld [vmem:[%s3] sm:$0xf]
        %v1190 = vld [vmem:[%s3 + $0x4] sm:$0xf]
        %v1191 = vld [vmem:[%s3 + $0x8] sm:$0xf]
        %v1192 = vld [vmem:[%s3 + $0xc] sm:$0xf]
        %v1193 = vld [vmem:[%s3 + $0x10] sm:$0xf]
        %v1194 = vld [vmem:[%s3 + $0x14] sm:$0xf]
        %v1195 = vld [vmem:[%s3 + $0x18] sm:$0xf]
        %v1196 = vld [vmem:[%s3 + $0x1c] sm:$0xf]
        %v1197 = vld [vmem:[%s3 + $0x20] sm:$0xf]
        %v1198 = vld [vmem:[%s3 + $0x24] sm:$0xf]
        %v1199 = vld [vmem:[%s3 + $0x28] sm:$0xf]
        %v1200 = vld [vmem:[%s3 + $0x2c] sm:$0xf]
        %v1201 = vld [vmem:[%s3 + $0x30] sm:$0xf]
        %v1202 = vld [vmem:[%s3 + $0x34] sm:$0xf]
        %v1203 = vld [vmem:[%s3 + $0x38] sm:$0xf]
        %v1204 = vld [vmem:[%s3 + $0x3c] sm:$0xf]
        %v1205 = vld [vmem:[%s4] sm:$0x1]
        %v1207 = vlaneseq
        %v1208 = vshrl.u32 %v1207, 7
        %v1209 = vsub.s32 0, %v1208
        %v1210 = vrot.slane %v1205, %v1209
        %v1228 = vunpack.c.l.b16 %v1189
        %v1229 = vunpack.c.l.b16 %v1190
        %v1230 = vunpack.c.l.b16 %v1191
        %v1231 = vunpack.c.l.b16 %v1192
        %v1232 = vunpack.c.l.b16 %v1193
        %v1233 = vunpack.c.l.b16 %v1194
        %v1234 = vunpack.c.l.b16 %v1195
        %v1235 = vunpack.c.l.b16 %v1196
        %v1236 = vunpack.c.l.b16 %v1197
        %v1237 = vunpack.c.l.b16 %v1198
        %v1238 = vunpack.c.l.b16 %v1199
        %v1239 = vunpack.c.l.b16 %v1200
        %v1240 = vunpack.c.l.b16 %v1201
        %v1241 = vunpack.c.l.b16 %v1202
        %v1242 = vunpack.c.l.b16 %v1203
        %v1243 = vunpack.c.l.b16 %v1204
        %v1244 = vpack.c.b16 %v1229, %v1228
        %v1245 = vpack.c.b16 %v1231, %v1230
        %v1246 = vpack.c.b16 %v1233, %v1232
        %v1247 = vpack.c.b16 %v1235, %v1234
        %v1248 = vpack.c.b16 %v1237, %v1236
        %v1249 = vpack.c.b16 %v1239, %v1238
        %v1250 = vpack.c.b16 %v1241, %v1240
        %v1251 = vpack.c.b16 %v1243, %v1242
        %1260 = vmatprep.subr.bf16.mxu0 0
        %1261 = vmatpush1.bf16.msra.mxu0 %v1244
        %1262 = vmatprep.subr.bf16.mxu0 0
        %1263 = vmatpush1.bf16.msra.mxu0 %v1245
        %1264 = vmatprep.subr.bf16.mxu0 0
        %1265 = vmatpush1.bf16.msra.mxu0 %v1246
        %1266 = vmatprep.subr.bf16.mxu0 0
        %1267 = vmatpush1.bf16.msra.mxu0 %v1247
        %1268 = vmatprep.subr.bf16.mxu0 0
        %1269 = vmatpush1.bf16.msra.mxu0 %v1248
        %1270 = vmatprep.subr.bf16.mxu0 0
        %1271 = vmatpush1.bf16.msra.mxu0 %v1249
        %1272 = vmatprep.subr.bf16.mxu0 0
        %1273 = vmatpush1.bf16.msra.mxu0 %v1250
        %1274 = vmatprep.subr.bf16.mxu0 0
        %1275 = vmatpush1.bf16.msra.mxu0 %v1251
        %1276 = vmatprep.subr.bf16.mxu0 0
        %1277 = vmatpush1.bf16.msra.mxu0 0
        %1278 = vmatprep.subr.bf16.mxu0 0
        %1279 = vmatpush1.bf16.msra.mxu0 0
        %1280 = vmatprep.subr.bf16.mxu0 0
        %1281 = vmatpush1.bf16.msra.mxu0 0
        %1282 = vmatprep.subr.bf16.mxu0 0
        %1283 = vmatpush1.bf16.msra.mxu0 0
        %1284 = vmatprep.subr.bf16.mxu0 0
        %1285 = vmatpush1.bf16.msra.mxu0 0
        %1286 = vmatprep.subr.bf16.mxu0 0
        %1287 = vmatpush1.bf16.msra.mxu0 0
        %1288 = vmatprep.subr.bf16.mxu0 0
        %1289 = vmatpush1.bf16.msra.mxu0 0
        %1290 = vmatprep.subr.bf16.mxu0 0
        %1291 = vmatpush1.bf16.msra.mxu0 0
        %1292 = vmatprep.mubr.bf16.mxu0 0
        %1293 = vmatmul.mubr.bf16.gmra.mrb[0].mxu0 %v1188
        %v1294 = vpop.f32.mrb[0].mxu0
        %v1295 = vadd.f32 %v1210, %v1294
        %v1296 = vpop.f32.mrb[0].mxu0
        %v1297 = vpop.f32.mrb[0].mxu0
        %v1298 = vpop.f32.mrb[0].mxu0
        %1299 = vdwg.mxu0
        %v1300 = vmul.f32 %v1295, %v1295
        %v1301 = vmul.f32 %v1295, %v1300
        %v1302 = vmul.f32 %v1301, 0.044715
        %v1303 = vadd.f32 %v1295, %v1302
        %v1304 = vmul.f32 %v1303, 0.7978846
        %v1305 = vtanh.pop %v1304
        %v1306 = vadd.f32 %v1305, 1.0
        %v1307 = vmul.f32 %v1306, 0.5
        %v1308 = vmul.f32 %v1295, %v1307
        %v1309 = vpack.c.bf16 %v1308, %v1308
        %v1310 = vld [vmem:[%s5] sm:$0xf]
        %v1311 = vld [vmem:[%s5 + $0x4] sm:$0xf]
        %v1312 = vld [vmem:[%s5 + $0x8] sm:$0xf]
        %v1313 = vld [vmem:[%s5 + $0xc] sm:$0xf]
        %v1314 = vld [vmem:[%s5 + $0x10] sm:$0xf]
        %v1315 = vld [vmem:[%s5 + $0x14] sm:$0xf]
        %v1316 = vld [vmem:[%s5 + $0x18] sm:$0xf]
        %v1317 = vld [vmem:[%s5 + $0x1c] sm:$0xf]
        %v1318 = vld [vmem:[%s5 + $0x20] sm:$0xf]
        %v1319 = vld [vmem:[%s5 + $0x24] sm:$0xf]
        %v1320 = vld [vmem:[%s5 + $0x28] sm:$0xf]
        %v1321 = vld [vmem:[%s5 + $0x2c] sm:$0xf]
        %v1322 = vld [vmem:[%s5 + $0x30] sm:$0xf]
        %v1323 = vld [vmem:[%s5 + $0x34] sm:$0xf]
        %v1324 = vld [vmem:[%s5 + $0x38] sm:$0xf]
        %v1325 = vld [vmem:[%s5 + $0x3c] sm:$0xf]
        %v1326 = vld [vmem:[%s6] sm:$0x1]
        %v1328 = vlaneseq
        %v1329 = vshrl.u32 %v1328, 7
        %v1330 = vsub.s32 0, %v1329
        %v1331 = vrot.slane %v1326, %v1330
        %v1349 = vunpack.c.l.b16 %v1310
        %v1350 = vunpack.c.l.b16 %v1311
        %v1351 = vunpack.c.l.b16 %v1312
        %v1352 = vunpack.c.l.b16 %v1313
        %v1353 = vunpack.c.l.b16 %v1314
        %v1354 = vunpack.c.l.b16 %v1315
        %v1355 = vunpack.c.l.b16 %v1316
        %v1356 = vunpack.c.l.b16 %v1317
        %v1357 = vunpack.c.l.b16 %v1318
        %v1358 = vunpack.c.l.b16 %v1319
        %v1359 = vunpack.c.l.b16 %v1320
        %v1360 = vunpack.c.l.b16 %v1321
        %v1361 = vunpack.c.l.b16 %v1322
        %v1362 = vunpack.c.l.b16 %v1323
        %v1363 = vunpack.c.l.b16 %v1324
        %v1364 = vunpack.c.l.b16 %v1325
        %v1365 = vpack.c.b16 %v1350, %v1349
        %v1366 = vpack.c.b16 %v1352, %v1351
        %v1367 = vpack.c.b16 %v1354, %v1353
        %v1368 = vpack.c.b16 %v1356, %v1355
        %v1369 = vpack.c.b16 %v1358, %v1357
        %v1370 = vpack.c.b16 %v1360, %v1359
        %v1371 = vpack.c.b16 %v1362, %v1361
        %v1372 = vpack.c.b16 %v1364, %v1363
        %1381 = vmatprep.subr.bf16.mxu0 0
        %1382 = vmatpush1.bf16.msra.mxu0 %v1365
        %1383 = vmatprep.subr.bf16.mxu0 0
        %1384 = vmatpush1.bf16.msra.mxu0 %v1366
        %1385 = vmatprep.subr.bf16.mxu0 0
        %1386 = vmatpush1.bf16.msra.mxu0 %v1367
        %1387 = vmatprep.subr.bf16.mxu0 0
        %1388 = vmatpush1.bf16.msra.mxu0 %v1368
        %1389 = vmatprep.subr.bf16.mxu0 0
        %1390 = vmatpush1.bf16.msra.mxu0 %v1369
        %1391 = vmatprep.subr.bf16.mxu0 0
        %1392 = vmatpush1.bf16.msra.mxu0 %v1370
        %1393 = vmatprep.subr.bf16.mxu0 0
        %1394 = vmatpush1.bf16.msra.mxu0 %v1371
        %1395 = vmatprep.subr.bf16.mxu0 0
        %1396 = vmatpush1.bf16.msra.mxu0 %v1372
        %1397 = vmatprep.subr.bf16.mxu0 0
        %1398 = vmatpush1.bf16.msra.mxu0 0
        %1399 = vmatprep.subr.bf16.mxu0 0
        %1400 = vmatpush1.bf16.msra.mxu0 0
        %1401 = vmatprep.subr.bf16.mxu0 0
        %1402 = vmatpush1.bf16.msra.mxu0 0
        %1403 = vmatprep.subr.bf16.mxu0 0
        %1404 = vmatpush1.bf16.msra.mxu0 0
        %1405 = vmatprep.subr.bf16.mxu0 0
        %1406 = vmatpush1.bf16.msra.mxu0 0
        %1407 = vmatprep.subr.bf16.mxu0 0
        %1408 = vmatpush1.bf16.msra.mxu0 0
        %1409 = vmatprep.subr.bf16.mxu0 0
        %1410 = vmatpush1.bf16.msra.mxu0 0
        %1411 = vmatprep.subr.bf16.mxu0 0
        %1412 = vmatpush1.bf16.msra.mxu0 0
        %1413 = vmatprep.mubr.bf16.mxu0 0
        %1414 = vmatmul.mubr.bf16.gmra.mrb[0].mxu0 %v1309
        %v1415 = vpop.f32.mrb[0].mxu0
        %v1416 = vadd.f32 %v1331, %v1415
        %v1417 = vpop.f32.mrb[0].mxu0
        %v1418 = vpop.f32.mrb[0].mxu0
        %v1419 = vpop.f32.mrb[0].mxu0
        %1420 = vdwg.mxu0
        %v1421 = vmul.f32 %v1416, %v1416
        %v1422 = vmul.f32 %v1416, %v1421
        %v1423 = vmul.f32 %v1422, 0.044715
        %v1424 = vadd.f32 %v1416, %v1423
        %v1425 = vmul.f32 %v1424, 0.7978846
        %v1426 = vtanh.pop %v1425
        %v1427 = vadd.f32 %v1426, 1.0
        %v1428 = vmul.f32 %v1427, 0.5
        %v1429 = vmul.f32 %v1416, %v1428
        %v1430 = vpack.c.bf16 %v1429, %v1429
        %v1431 = vld [vmem:[%s7] sm:$0xf]
        %v1432 = vld [vmem:[%s7 + $0x4] sm:$0xf]
        %v1433 = vld [vmem:[%s7 + $0x8] sm:$0xf]
        %v1434 = vld [vmem:[%s7 + $0xc] sm:$0xf]
        %v1435 = vld [vmem:[%s7 + $0x10] sm:$0xf]
        %v1436 = vld [vmem:[%s7 + $0x14] sm:$0xf]
        %v1437 = vld [vmem:[%s7 + $0x18] sm:$0xf]
        %v1438 = vld [vmem:[%s7 + $0x1c] sm:$0xf]
        %v1439 = vld [vmem:[%s7 + $0x20] sm:$0xf]
        %v1440 = vld [vmem:[%s7 + $0x24] sm:$0xf]
        %v1441 = vld [vmem:[%s7 + $0x28] sm:$0xf]
        %v1442 = vld [vmem:[%s7 + $0x2c] sm:$0xf]
        %v1443 = vld [vmem:[%s7 + $0x30] sm:$0xf]
        %v1444 = vld [vmem:[%s7 + $0x34] sm:$0xf]
        %v1445 = vld [vmem:[%s7 + $0x38] sm:$0xf]
        %v1446 = vld [vmem:[%s7 + $0x3c] sm:$0xf]
        %v1447 = vld [vmem:[%s8] sm:$0x1]
        %v1449 = vlaneseq
        %v1450 = vshrl.u32 %v1449, 7
        %v1451 = vsub.s32 0, %v1450
        %v1452 = vrot.slane %v1447, %v1451
        %v1470 = vunpack.c.l.b16 %v1431
        %v1471 = vunpack.c.l.b16 %v1432
        %v1472 = vunpack.c.l.b16 %v1433
        %v1473 = vunpack.c.l.b16 %v1434
        %v1474 = vunpack.c.l.b16 %v1435
        %v1475 = vunpack.c.l.b16 %v1436
        %v1476 = vunpack.c.l.b16 %v1437
        %v1477 = vunpack.c.l.b16 %v1438
        %v1478 = vunpack.c.l.b16 %v1439
        %v1479 = vunpack.c.l.b16 %v1440
        %v1480 = vunpack.c.l.b16 %v1441
        %v1481 = vunpack.c.l.b16 %v1442
        %v1482 = vunpack.c.l.b16 %v1443
        %v1483 = vunpack.c.l.b16 %v1444
        %v1484 = vunpack.c.l.b16 %v1445
        %v1485 = vunpack.c.l.b16 %v1446
        %v1486 = vpack.c.b16 %v1471, %v1470
        %v1487 = vpack.c.b16 %v1473, %v1472
        %v1488 = vpack.c.b16 %v1475, %v1474
        %v1489 = vpack.c.b16 %v1477, %v1476
        %v1490 = vpack.c.b16 %v1479, %v1478
        %v1491 = vpack.c.b16 %v1481, %v1480
        %v1492 = vpack.c.b16 %v1483, %v1482
        %v1493 = vpack.c.b16 %v1485, %v1484
        %1502 = vmatprep.subr.bf16.mxu0 0
        %1503 = vmatpush1.bf16.msra.mxu0 %v1486
        %1504 = vmatprep.subr.bf16.mxu0 0
        %1505 = vmatpush1.bf16.msra.mxu0 %v1487
        %1506 = vmatprep.subr.bf16.mxu0 0
        %1507 = vmatpush1.bf16.msra.mxu0 %v1488
        %1508 = vmatprep.subr.bf16.mxu0 0
        %1509 = vmatpush1.bf16.msra.mxu0 %v1489
        %1510 = vmatprep.subr.bf16.mxu0 0
        %1511 = vmatpush1.bf16.msra.mxu0 %v1490
        %1512 = vmatprep.subr.bf16.mxu0 0
        %1513 = vmatpush1.bf16.msra.mxu0 %v1491
        %1514 = vmatprep.subr.bf16.mxu0 0
        %1515 = vmatpush1.bf16.msra.mxu0 %v1492
        %1516 = vmatprep.subr.bf16.mxu0 0
        %1517 = vmatpush1.bf16.msra.mxu0 %v1493
        %1518 = vmatprep.subr.bf16.mxu0 0
        %1519 = vmatpush1.bf16.msra.mxu0 0
        %1520 = vmatprep.subr.bf16.mxu0 0
        %1521 = vmatpush1.bf16.msra.mxu0 0
        %1522 = vmatprep.subr.bf16.mxu0 0
        %1523 = vmatpush1.bf16.msra.mxu0 0
        %1524 = vmatprep.subr.bf16.mxu0 0
        %1525 = vmatpush1.bf16.msra.mxu0 0
        %1526 = vmatprep.subr.bf16.mxu0 0
        %1527 = vmatpush1.bf16.msra.mxu0 0
        %1528 = vmatprep.subr.bf16.mxu0 0
        %1529 = vmatpush1.bf16.msra.mxu0 0
        %1530 = vmatprep.subr.bf16.mxu0 0
        %1531 = vmatpush1.bf16.msra.mxu0 0
        %1532 = vmatprep.subr.bf16.mxu0 0
        %1533 = vmatpush1.bf16.msra.mxu0 0
        %1534 = vmatprep.mubr.bf16.mxu0 0
        %1535 = vmatmul.mubr.bf16.gmra.mrb[0].mxu0 %v1430
        %v1536 = vpop.f32.mrb[0].mxu0
        %v1537 = vadd.f32 %v1452, %v1536
        %v1538 = vpop.f32.mrb[0].mxu0
        %v1539 = vpop.f32.mrb[0].mxu0
        %v1540 = vpop.f32.mrb[0].mxu0
        %1541 = vdwg.mxu0
        %v1542 = vmul.f32 %v1537, %v1537
        %v1543 = vmul.f32 %v1537, %v1542
        %v1544 = vmul.f32 %v1543, 0.044715
        %v1545 = vadd.f32 %v1537, %v1544
        %v1546 = vmul.f32 %v1545, 0.7978846
        %v1547 = vtanh.pop %v1546
        %v1548 = vadd.f32 %v1547, 1.0
        %v1549 = vmul.f32 %v1548, 0.5
        %v1550 = vmul.f32 %v1537, %v1549
        %v1551 = vpack.c.bf16 %v1550, %v1550
        %v1552 = vld [vmem:[%s9] sm:$0xf]
        %v1553 = vld [vmem:[%s9 + $0x4] sm:$0xf]
        %v1554 = vld [vmem:[%s9 + $0x8] sm:$0xf]
        %v1555 = vld [vmem:[%s9 + $0xc] sm:$0xf]
        %v1556 = vld [vmem:[%s9 + $0x10] sm:$0xf]
        %v1557 = vld [vmem:[%s9 + $0x14] sm:$0xf]
        %v1558 = vld [vmem:[%s9 + $0x18] sm:$0xf]
        %v1559 = vld [vmem:[%s9 + $0x1c] sm:$0xf]
        %v1560 = vld [vmem:[%s9 + $0x20] sm:$0xf]
        %v1561 = vld [vmem:[%s9 + $0x24] sm:$0xf]
        %v1562 = vld [vmem:[%s9 + $0x28] sm:$0xf]
        %v1563 = vld [vmem:[%s9 + $0x2c] sm:$0xf]
        %v1564 = vld [vmem:[%s9 + $0x30] sm:$0xf]
        %v1565 = vld [vmem:[%s9 + $0x34] sm:$0xf]
        %v1566 = vld [vmem:[%s9 + $0x38] sm:$0xf]
        %v1567 = vld [vmem:[%s9 + $0x3c] sm:$0xf]
        %v1568 = vld [vmem:[%s10] sm:$0x1]
        %v1570 = vlaneseq
        %v1571 = vshrl.u32 %v1570, 7
        %v1572 = vsub.s32 0, %v1571
        %v1573 = vrot.slane %v1568, %v1572
        %v1591 = vunpack.c.l.b16 %v1552
        %v1592 = vunpack.c.l.b16 %v1553
        %v1593 = vunpack.c.l.b16 %v1554
        %v1594 = vunpack.c.l.b16 %v1555
        %v1595 = vunpack.c.l.b16 %v1556
        %v1596 = vunpack.c.l.b16 %v1557
        %v1597 = vunpack.c.l.b16 %v1558
        %v1598 = vunpack.c.l.b16 %v1559
        %v1599 = vunpack.c.l.b16 %v1560
        %v1600 = vunpack.c.l.b16 %v1561
        %v1601 = vunpack.c.l.b16 %v1562
        %v1602 = vunpack.c.l.b16 %v1563
        %v1603 = vunpack.c.l.b16 %v1564
        %v1604 = vunpack.c.l.b16 %v1565
        %v1605 = vunpack.c.l.b16 %v1566
        %v1606 = vunpack.c.l.b16 %v1567
        %v1607 = vpack.c.b16 %v1592, %v1591
        %v1608 = vpack.c.b16 %v1594, %v1593
        %v1609 = vpack.c.b16 %v1596, %v1595
        %v1610 = vpack.c.b16 %v1598, %v1597
        %v1611 = vpack.c.b16 %v1600, %v1599
        %v1612 = vpack.c.b16 %v1602, %v1601
        %v1613 = vpack.c.b16 %v1604, %v1603
        %v1614 = vpack.c.b16 %v1606, %v1605
        %1623 = vmatprep.subr.bf16.mxu0 0
        %1624 = vmatpush1.bf16.msra.mxu0 %v1607
        %1625 = vmatprep.subr.bf16.mxu0 0
        %1626 = vmatpush1.bf16.msra.mxu0 %v1608
        %1627 = vmatprep.subr.bf16.mxu0 0
        %1628 = vmatpush1.bf16.msra.mxu0 %v1609
        %1629 = vmatprep.subr.bf16.mxu0 0
        %1630 = vmatpush1.bf16.msra.mxu0 %v1610
        %1631 = vmatprep.subr.bf16.mxu0 0
        %1632 = vmatpush1.bf16.msra.mxu0 %v1611
        %1633 = vmatprep.subr.bf16.mxu0 0
        %1634 = vmatpush1.bf16.msra.mxu0 %v1612
        %1635 = vmatprep.subr.bf16.mxu0 0
        %1636 = vmatpush1.bf16.msra.mxu0 %v1613
        %1637 = vmatprep.subr.bf16.mxu0 0
        %1638 = vmatpush1.bf16.msra.mxu0 %v1614
        %1639 = vmatprep.subr.bf16.mxu0 0
        %1640 = vmatpush1.bf16.msra.mxu0 0
        %1641 = vmatprep.subr.bf16.mxu0 0
        %1642 = vmatpush1.bf16.msra.mxu0 0
        %1643 = vmatprep.subr.bf16.mxu0 0
        %1644 = vmatpush1.bf16.msra.mxu0 0
        %1645 = vmatprep.subr.bf16.mxu0 0
        %1646 = vmatpush1.bf16.msra.mxu0 0
        %1647 = vmatprep.subr.bf16.mxu0 0
        %1648 = vmatpush1.bf16.msra.mxu0 0
        %1649 = vmatprep.subr.bf16.mxu0 0
        %1650 = vmatpush1.bf16.msra.mxu0 0
        %1651 = vmatprep.subr.bf16.mxu0 0
        %1652 = vmatpush1.bf16.msra.mxu0 0
        %1653 = vmatprep.subr.bf16.mxu0 0
        %1654 = vmatpush1.bf16.msra.mxu0 0
        %1655 = vmatprep.mubr.bf16.mxu0 0
        %1656 = vmatmul.mubr.bf16.gmra.mrb[0].mxu0 %v1551
        %v1657 = vpop.f32.mrb[0].mxu0
        %v1658 = vadd.f32 %v1573, %v1657
        %v1659 = vpop.f32.mrb[0].mxu0
        %v1660 = vpop.f32.mrb[0].mxu0
        %v1661 = vpop.f32.mrb[0].mxu0
        %1662 = vdwg.mxu0
        %v1663 = vmul.f32 %v1658, %v1658
        %v1664 = vmul.f32 %v1658, %v1663
        %v1665 = vmul.f32 %v1664, 0.044715
        %v1666 = vadd.f32 %v1658, %v1665
        %v1667 = vmul.f32 %v1666, 0.7978846
        %v1668 = vtanh.pop %v1667
        %v1669 = vadd.f32 %v1668, 1.0
        %v1670 = vmul.f32 %v1669, 0.5
        %v1671 = vmul.f32 %v1658, %v1670
        %v1672 = vpack.c.bf16 %v1671, %v1671
        %v1673 = vld [vmem:[%s11] sm:$0xf]
        %v1674 = vld [vmem:[%s11 + $0x4] sm:$0xf]
        %v1675 = vld [vmem:[%s11 + $0x8] sm:$0xf]
        %v1676 = vld [vmem:[%s11 + $0xc] sm:$0xf]
        %v1677 = vld [vmem:[%s11 + $0x10] sm:$0xf]
        %v1678 = vld [vmem:[%s11 + $0x14] sm:$0xf]
        %v1679 = vld [vmem:[%s11 + $0x18] sm:$0xf]
        %v1680 = vld [vmem:[%s11 + $0x1c] sm:$0xf]
        %v1681 = vld [vmem:[%s11 + $0x20] sm:$0xf]
        %v1682 = vld [vmem:[%s11 + $0x24] sm:$0xf]
        %v1683 = vld [vmem:[%s11 + $0x28] sm:$0xf]
        %v1684 = vld [vmem:[%s11 + $0x2c] sm:$0xf]
        %v1685 = vld [vmem:[%s11 + $0x30] sm:$0xf]
        %v1686 = vld [vmem:[%s11 + $0x34] sm:$0xf]
        %v1687 = vld [vmem:[%s11 + $0x38] sm:$0xf]
        %v1688 = vld [vmem:[%s11 + $0x3c] sm:$0xf]
        %v1689 = vld [vmem:[%s12] sm:$0x1]
        %v1691 = vlaneseq
        %v1692 = vshrl.u32 %v1691, 7
        %v1693 = vsub.s32 0, %v1692
        %v1694 = vrot.slane %v1689, %v1693
        %v1712 = vunpack.c.l.b16 %v1673
        %v1713 = vunpack.c.l.b16 %v1674
        %v1714 = vunpack.c.l.b16 %v1675
        %v1715 = vunpack.c.l.b16 %v1676
        %v1716 = vunpack.c.l.b16 %v1677
        %v1717 = vunpack.c.l.b16 %v1678
        %v1718 = vunpack.c.l.b16 %v1679
        %v1719 = vunpack.c.l.b16 %v1680
        %v1720 = vunpack.c.l.b16 %v1681
        %v1721 = vunpack.c.l.b16 %v1682
        %v1722 = vunpack.c.l.b16 %v1683
        %v1723 = vunpack.c.l.b16 %v1684
        %v1724 = vunpack.c.l.b16 %v1685
        %v1725 = vunpack.c.l.b16 %v1686
        %v1726 = vunpack.c.l.b16 %v1687
        %v1727 = vunpack.c.l.b16 %v1688
        %v1728 = vpack.c.b16 %v1713, %v1712
        %v1729 = vpack.c.b16 %v1715, %v1714
        %v1730 = vpack.c.b16 %v1717, %v1716
        %v1731 = vpack.c.b16 %v1719, %v1718
        %v1732 = vpack.c.b16 %v1721, %v1720
        %v1733 = vpack.c.b16 %v1723, %v1722
        %v1734 = vpack.c.b16 %v1725, %v1724
        %v1735 = vpack.c.b16 %v1727, %v1726
        %1744 = vmatprep.subr.bf16.mxu0 0
        %1745 = vmatpush1.bf16.msra.mxu0 %v1728
        %1746 = vmatprep.subr.bf16.mxu0 0
        %1747 = vmatpush1.bf16.msra.mxu0 %v1729
        %1748 = vmatprep.subr.bf16.mxu0 0
        %1749 = vmatpush1.bf16.msra.mxu0 %v1730
        %1750 = vmatprep.subr.bf16.mxu0 0
        %1751 = vmatpush1.bf16.msra.mxu0 %v1731
        %1752 = vmatprep.subr.bf16.mxu0 0
        %1753 = vmatpush1.bf16.msra.mxu0 %v1732
        %1754 = vmatprep.subr.bf16.mxu0 0
        %1755 = vmatpush1.bf16.msra.mxu0 %v1733
        %1756 = vmatprep.subr.bf16.mxu0 0
        %1757 = vmatpush1.bf16.msra.mxu0 %v1734
        %1758 = vmatprep.subr.bf16.mxu0 0
        %1759 = vmatpush1.bf16.msra.mxu0 %v1735
        %1760 = vmatprep.subr.bf16.mxu0 0
        %1761 = vmatpush1.bf16.msra.mxu0 0
        %1762 = vmatprep.subr.bf16.mxu0 0
        %1763 = vmatpush1.bf16.msra.mxu0 0
        %1764 = vmatprep.subr.bf16.mxu0 0
        %1765 = vmatpush1.bf16.msra.mxu0 0
        %1766 = vmatprep.subr.bf16.mxu0 0
        %1767 = vmatpush1.bf16.msra.mxu0 0
        %1768 = vmatprep.subr.bf16.mxu0 0
        %1769 = vmatpush1.bf16.msra.mxu0 0
        %1770 = vmatprep.subr.bf16.mxu0 0
        %1771 = vmatpush1.bf16.msra.mxu0 0
        %1772 = vmatprep.subr.bf16.mxu0 0
        %1773 = vmatpush1.bf16.msra.mxu0 0
        %1774 = vmatprep.subr.bf16.mxu0 0
        %1775 = vmatpush1.bf16.msra.mxu0 0
        %1776 = vmatprep.mubr.bf16.mxu0 0
        %1777 = vmatmul.mubr.bf16.gmra.mrb[0].mxu0 %v1672
        %v1778 = vpop.f32.mrb[0].mxu0
        %v1779 = vadd.f32 %v1694, %v1778
        %v1780 = vpop.f32.mrb[0].mxu0
        %v1781 = vpop.f32.mrb[0].mxu0
        %v1782 = vpop.f32.mrb[0].mxu0
        %1783 = vdwg.mxu0
        %v1784 = vmul.f32 %v1779, %v1779
        %v1785 = vmul.f32 %v1779, %v1784
        %v1786 = vmul.f32 %v1785, 0.044715
        %v1787 = vadd.f32 %v1779, %v1786
        %v1788 = vmul.f32 %v1787, 0.7978846
        %v1789 = vtanh.pop %v1788
        %v1790 = vadd.f32 %v1789, 1.0
        %v1791 = vmul.f32 %v1790, 0.5
        %v1792 = vmul.f32 %v1779, %v1791
        %v1793 = vpack.c.bf16 %v1792, %v1792
        %v1794 = vld [vmem:[%s13] sm:$0xf]
        %v1795 = vld [vmem:[%s13 + $0x4] sm:$0xf]
        %v1796 = vld [vmem:[%s13 + $0x8] sm:$0xf]
        %v1797 = vld [vmem:[%s13 + $0xc] sm:$0xf]
        %v1798 = vld [vmem:[%s13 + $0x10] sm:$0xf]
        %v1799 = vld [vmem:[%s13 + $0x14] sm:$0xf]
        %v1800 = vld [vmem:[%s13 + $0x18] sm:$0xf]
        %v1801 = vld [vmem:[%s13 + $0x1c] sm:$0xf]
        %v1802 = vld [vmem:[%s13 + $0x20] sm:$0xf]
        %v1803 = vld [vmem:[%s13 + $0x24] sm:$0xf]
        %v1804 = vld [vmem:[%s13 + $0x28] sm:$0xf]
        %v1805 = vld [vmem:[%s13 + $0x2c] sm:$0xf]
        %v1806 = vld [vmem:[%s13 + $0x30] sm:$0xf]
        %v1807 = vld [vmem:[%s13 + $0x34] sm:$0xf]
        %v1808 = vld [vmem:[%s13 + $0x38] sm:$0xf]
        %v1809 = vld [vmem:[%s13 + $0x3c] sm:$0xf]
        %v1810 = vld [vmem:[%s14] sm:$0x1]
        %v1812 = vlaneseq
        %v1813 = vshrl.u32 %v1812, 7
        %v1814 = vsub.s32 0, %v1813
        %v1815 = vrot.slane %v1810, %v1814
        %v1833 = vunpack.c.l.b16 %v1794
        %v1834 = vunpack.c.l.b16 %v1795
        %v1835 = vunpack.c.l.b16 %v1796
        %v1836 = vunpack.c.l.b16 %v1797
        %v1837 = vunpack.c.l.b16 %v1798
        %v1838 = vunpack.c.l.b16 %v1799
        %v1839 = vunpack.c.l.b16 %v1800
        %v1840 = vunpack.c.l.b16 %v1801
        %v1841 = vunpack.c.l.b16 %v1802
        %v1842 = vunpack.c.l.b16 %v1803
        %v1843 = vunpack.c.l.b16 %v1804
        %v1844 = vunpack.c.l.b16 %v1805
        %v1845 = vunpack.c.l.b16 %v1806
        %v1846 = vunpack.c.l.b16 %v1807
        %v1847 = vunpack.c.l.b16 %v1808
        %v1848 = vunpack.c.l.b16 %v1809
        %v1849 = vpack.c.b16 %v1834, %v1833
        %v1850 = vpack.c.b16 %v1836, %v1835
        %v1851 = vpack.c.b16 %v1838, %v1837
        %v1852 = vpack.c.b16 %v1840, %v1839
        %v1853 = vpack.c.b16 %v1842, %v1841
        %v1854 = vpack.c.b16 %v1844, %v1843
        %v1855 = vpack.c.b16 %v1846, %v1845
        %v1856 = vpack.c.b16 %v1848, %v1847
        %1865 = vmatprep.subr.bf16.mxu0 0
        %1866 = vmatpush1.bf16.msra.mxu0 %v1849
        %1867 = vmatprep.subr.bf16.mxu0 0
        %1868 = vmatpush1.bf16.msra.mxu0 %v1850
        %1869 = vmatprep.subr.bf16.mxu0 0
        %1870 = vmatpush1.bf16.msra.mxu0 %v1851
        %1871 = vmatprep.subr.bf16.mxu0 0
        %1872 = vmatpush1.bf16.msra.mxu0 %v1852
        %1873 = vmatprep.subr.bf16.mxu0 0
        %1874 = vmatpush1.bf16.msra.mxu0 %v1853
        %1875 = vmatprep.subr.bf16.mxu0 0
        %1876 = vmatpush1.bf16.msra.mxu0 %v1854
        %1877 = vmatprep.subr.bf16.mxu0 0
        %1878 = vmatpush1.bf16.msra.mxu0 %v1855
        %1879 = vmatprep.subr.bf16.mxu0 0
        %1880 = vmatpush1.bf16.msra.mxu0 %v1856
        %1881 = vmatprep.subr.bf16.mxu0 0
        %1882 = vmatpush1.bf16.msra.mxu0 0
        %1883 = vmatprep.subr.bf16.mxu0 0
        %1884 = vmatpush1.bf16.msra.mxu0 0
        %1885 = vmatprep.subr.bf16.mxu0 0
        %1886 = vmatpush1.bf16.msra.mxu0 0
        %1887 = vmatprep.subr.bf16.mxu0 0
        %1888 = vmatpush1.bf16.msra.mxu0 0
        %1889 = vmatprep.subr.bf16.mxu0 0
        %1890 = vmatpush1.bf16.msra.mxu0 0
        %1891 = vmatprep.subr.bf16.mxu0 0
        %1892 = vmatpush1.bf16.msra.mxu0 0
        %1893 = vmatprep.subr.bf16.mxu0 0
        %1894 = vmatpush1.bf16.msra.mxu0 0
        %1895 = vmatprep.subr.bf16.mxu0 0
        %1896 = vmatpush1.bf16.msra.mxu0 0
        %1897 = vmatprep.mubr.bf16.mxu0 0
        %1898 = vmatmul.mubr.bf16.gmra.mrb[0].mxu0 %v1793
        %v1899 = vpop.f32.mrb[0].mxu0
        %v1900 = vadd.f32 %v1815, %v1899
        %v1901 = vpop.f32.mrb[0].mxu0
        %v1902 = vpop.f32.mrb[0].mxu0
        %v1903 = vpop.f32.mrb[0].mxu0
        %1904 = vdwg.mxu0
        %v1905 = vmul.f32 %v1900, %v1900
        %v1906 = vmul.f32 %v1900, %v1905
        %v1907 = vmul.f32 %v1906, 0.044715
        %v1908 = vadd.f32 %v1900, %v1907
        %v1909 = vmul.f32 %v1908, 0.7978846
        %v1910 = vtanh.pop %v1909
        %v1911 = vadd.f32 %v1910, 1.0
        %v1912 = vmul.f32 %v1911, 0.5
        %v1913 = vmul.f32 %v1900, %v1912
        %v1914 = vpack.c.bf16 %v1913, %v1913
        %v1915 = vld [vmem:[%s15] sm:$0xf]
        %v1916 = vld [vmem:[%s15 + $0x4] sm:$0xf]
        %v1917 = vld [vmem:[%s15 + $0x8] sm:$0xf]
        %v1918 = vld [vmem:[%s15 + $0xc] sm:$0xf]
        %v1919 = vld [vmem:[%s15 + $0x10] sm:$0xf]
        %v1920 = vld [vmem:[%s15 + $0x14] sm:$0xf]
        %v1921 = vld [vmem:[%s15 + $0x18] sm:$0xf]
        %v1922 = vld [vmem:[%s15 + $0x1c] sm:$0xf]
        %v1923 = vld [vmem:[%s15 + $0x20] sm:$0xf]
        %v1924 = vld [vmem:[%s15 + $0x24] sm:$0xf]
        %v1925 = vld [vmem:[%s15 + $0x28] sm:$0xf]
        %v1926 = vld [vmem:[%s15 + $0x2c] sm:$0xf]
        %v1927 = vld [vmem:[%s15 + $0x30] sm:$0xf]
        %v1928 = vld [vmem:[%s15 + $0x34] sm:$0xf]
        %v1929 = vld [vmem:[%s15 + $0x38] sm:$0xf]
        %v1930 = vld [vmem:[%s15 + $0x3c] sm:$0xf]
        %v1931 = vld [vmem:[%s16] sm:$0x1]
        %v1933 = vlaneseq
        %v1934 = vshrl.u32 %v1933, 7
        %v1935 = vsub.s32 0, %v1934
        %v1936 = vrot.slane %v1931, %v1935
        %v1954 = vunpack.c.l.b16 %v1915
        %v1955 = vunpack.c.l.b16 %v1916
        %v1956 = vunpack.c.l.b16 %v1917
        %v1957 = vunpack.c.l.b16 %v1918
        %v1958 = vunpack.c.l.b16 %v1919
        %v1959 = vunpack.c.l.b16 %v1920
        %v1960 = vunpack.c.l.b16 %v1921
        %v1961 = vunpack.c.l.b16 %v1922
        %v1962 = vunpack.c.l.b16 %v1923
        %v1963 = vunpack.c.l.b16 %v1924
        %v1964 = vunpack.c.l.b16 %v1925
        %v1965 = vunpack.c.l.b16 %v1926
        %v1966 = vunpack.c.l.b16 %v1927
        %v1967 = vunpack.c.l.b16 %v1928
        %v1968 = vunpack.c.l.b16 %v1929
        %v1969 = vunpack.c.l.b16 %v1930
        %v1970 = vpack.c.b16 %v1955, %v1954
        %v1971 = vpack.c.b16 %v1957, %v1956
        %v1972 = vpack.c.b16 %v1959, %v1958
        %v1973 = vpack.c.b16 %v1961, %v1960
        %v1974 = vpack.c.b16 %v1963, %v1962
        %v1975 = vpack.c.b16 %v1965, %v1964
        %v1976 = vpack.c.b16 %v1967, %v1966
        %v1977 = vpack.c.b16 %v1969, %v1968
        %1986 = vmatprep.subr.bf16.mxu0 0
        %1987 = vmatpush1.bf16.msra.mxu0 %v1970
        %1988 = vmatprep.subr.bf16.mxu0 0
        %1989 = vmatpush1.bf16.msra.mxu0 %v1971
        %1990 = vmatprep.subr.bf16.mxu0 0
        %1991 = vmatpush1.bf16.msra.mxu0 %v1972
        %1992 = vmatprep.subr.bf16.mxu0 0
        %1993 = vmatpush1.bf16.msra.mxu0 %v1973
        %1994 = vmatprep.subr.bf16.mxu0 0
        %1995 = vmatpush1.bf16.msra.mxu0 %v1974
        %1996 = vmatprep.subr.bf16.mxu0 0
        %1997 = vmatpush1.bf16.msra.mxu0 %v1975
        %1998 = vmatprep.subr.bf16.mxu0 0
        %1999 = vmatpush1.bf16.msra.mxu0 %v1976
        %2000 = vmatprep.subr.bf16.mxu0 0
        %2001 = vmatpush1.bf16.msra.mxu0 %v1977
        %2002 = vmatprep.subr.bf16.mxu0 0
        %2003 = vmatpush1.bf16.msra.mxu0 0
        %2004 = vmatprep.subr.bf16.mxu0 0
        %2005 = vmatpush1.bf16.msra.mxu0 0
        %2006 = vmatprep.subr.bf16.mxu0 0
        %2007 = vmatpush1.bf16.msra.mxu0 0
        %2008 = vmatprep.subr.bf16.mxu0 0
        %2009 = vmatpush1.bf16.msra.mxu0 0
        %2010 = vmatprep.subr.bf16.mxu0 0
        %2011 = vmatpush1.bf16.msra.mxu0 0
        %2012 = vmatprep.subr.bf16.mxu0 0
        %2013 = vmatpush1.bf16.msra.mxu0 0
        %2014 = vmatprep.subr.bf16.mxu0 0
        %2015 = vmatpush1.bf16.msra.mxu0 0
        %2016 = vmatprep.subr.bf16.mxu0 0
        %2017 = vmatpush1.bf16.msra.mxu0 0
        %2018 = vmatprep.mubr.bf16.mxu0 0
        %2019 = vmatmul.mubr.bf16.gmra.mrb[0].mxu0 %v1914
        %v2020 = vpop.f32.mrb[0].mxu0
        %v2021 = vadd.f32 %v1936, %v2020
        %v2022 = vpop.f32.mrb[0].mxu0
        %v2023 = vpop.f32.mrb[0].mxu0
        %v2024 = vpop.f32.mrb[0].mxu0
        %2025 = vdwg.mxu0
        %v2026 = vmul.f32 %v2021, %v2021
        %v2027 = vmul.f32 %v2021, %v2026
        %v2028 = vmul.f32 %v2027, 0.044715
        %v2029 = vadd.f32 %v2021, %v2028
        %v2030 = vmul.f32 %v2029, 0.7978846
        %v2031 = vtanh.pop %v2030
        %v2032 = vadd.f32 %v2031, 1.0
        %v2033 = vmul.f32 %v2032, 0.5
        %v2034 = vmul.f32 %v2021, %v2033
        %v2035 = vpack.c.bf16 %v2034, %v2034
        %v2036 = vld [vmem:[%s17] sm:$0xf]
        %v2037 = vld [vmem:[%s17 + $0x4] sm:$0xf]
        %v2038 = vld [vmem:[%s17 + $0x8] sm:$0xf]
        %v2039 = vld [vmem:[%s17 + $0xc] sm:$0xf]
        %v2040 = vld [vmem:[%s17 + $0x10] sm:$0xf]
        %v2041 = vld [vmem:[%s17 + $0x14] sm:$0xf]
        %v2042 = vld [vmem:[%s17 + $0x18] sm:$0xf]
        %v2043 = vld [vmem:[%s17 + $0x1c] sm:$0xf]
        %v2044 = vld [vmem:[%s17 + $0x20] sm:$0xf]
        %v2045 = vld [vmem:[%s17 + $0x24] sm:$0xf]
        %v2046 = vld [vmem:[%s17 + $0x28] sm:$0xf]
        %v2047 = vld [vmem:[%s17 + $0x2c] sm:$0xf]
        %v2048 = vld [vmem:[%s17 + $0x30] sm:$0xf]
        %v2049 = vld [vmem:[%s17 + $0x34] sm:$0xf]
        %v2050 = vld [vmem:[%s17 + $0x38] sm:$0xf]
        %v2051 = vld [vmem:[%s17 + $0x3c] sm:$0xf]
        %v2052 = vld [vmem:[%s18] sm:$0x1]
        %v2054 = vlaneseq
        %v2055 = vshrl.u32 %v2054, 7
        %v2056 = vsub.s32 0, %v2055
        %v2057 = vrot.slane %v2052, %v2056
        %v2075 = vunpack.c.l.b16 %v2036
        %v2076 = vunpack.c.l.b16 %v2037
        %v2077 = vunpack.c.l.b16 %v2038
        %v2078 = vunpack.c.l.b16 %v2039
        %v2079 = vunpack.c.l.b16 %v2040
        %v2080 = vunpack.c.l.b16 %v2041
        %v2081 = vunpack.c.l.b16 %v2042
        %v2082 = vunpack.c.l.b16 %v2043
        %v2083 = vunpack.c.l.b16 %v2044
        %v2084 = vunpack.c.l.b16 %v2045
        %v2085 = vunpack.c.l.b16 %v2046
        %v2086 = vunpack.c.l.b16 %v2047
        %v2087 = vunpack.c.l.b16 %v2048
        %v2088 = vunpack.c.l.b16 %v2049
        %v2089 = vunpack.c.l.b16 %v2050
        %v2090 = vunpack.c.l.b16 %v2051
        %v2091 = vpack.c.b16 %v2076, %v2075
        %v2092 = vpack.c.b16 %v2078, %v2077
        %v2093 = vpack.c.b16 %v2080, %v2079
        %v2094 = vpack.c.b16 %v2082, %v2081
        %v2095 = vpack.c.b16 %v2084, %v2083
        %v2096 = vpack.c.b16 %v2086, %v2085
        %v2097 = vpack.c.b16 %v2088, %v2087
        %v2098 = vpack.c.b16 %v2090, %v2089
        %2107 = vmatprep.subr.bf16.mxu0 0
        %2108 = vmatpush1.bf16.msra.mxu0 %v2091
        %2109 = vmatprep.subr.bf16.mxu0 0
        %2110 = vmatpush1.bf16.msra.mxu0 %v2092
        %2111 = vmatprep.subr.bf16.mxu0 0
        %2112 = vmatpush1.bf16.msra.mxu0 %v2093
        %2113 = vmatprep.subr.bf16.mxu0 0
        %2114 = vmatpush1.bf16.msra.mxu0 %v2094
        %2115 = vmatprep.subr.bf16.mxu0 0
        %2116 = vmatpush1.bf16.msra.mxu0 %v2095
        %2117 = vmatprep.subr.bf16.mxu0 0
        %2118 = vmatpush1.bf16.msra.mxu0 %v2096
        %2119 = vmatprep.subr.bf16.mxu0 0
        %2120 = vmatpush1.bf16.msra.mxu0 %v2097
        %2121 = vmatprep.subr.bf16.mxu0 0
        %2122 = vmatpush1.bf16.msra.mxu0 %v2098
        %2123 = vmatprep.subr.bf16.mxu0 0
        %2124 = vmatpush1.bf16.msra.mxu0 0
        %2125 = vmatprep.subr.bf16.mxu0 0
        %2126 = vmatpush1.bf16.msra.mxu0 0
        %2127 = vmatprep.subr.bf16.mxu0 0
        %2128 = vmatpush1.bf16.msra.mxu0 0
        %2129 = vmatprep.subr.bf16.mxu0 0
        %2130 = vmatpush1.bf16.msra.mxu0 0
        %2131 = vmatprep.subr.bf16.mxu0 0
        %2132 = vmatpush1.bf16.msra.mxu0 0
        %2133 = vmatprep.subr.bf16.mxu0 0
        %2134 = vmatpush1.bf16.msra.mxu0 0
        %2135 = vmatprep.subr.bf16.mxu0 0
        %2136 = vmatpush1.bf16.msra.mxu0 0
        %2137 = vmatprep.subr.bf16.mxu0 0
        %2138 = vmatpush1.bf16.msra.mxu0 0
        %2139 = vmatprep.mubr.bf16.mxu0 0
        %2140 = vmatmul.mubr.bf16.gmra.mrb[0].mxu0 %v2035
        %v2141 = vpop.f32.mrb[0].mxu0
        %v2142 = vadd.f32 %v2057, %v2141
        %v2143 = vpop.f32.mrb[0].mxu0
        %v2144 = vpop.f32.mrb[0].mxu0
        %v2145 = vpop.f32.mrb[0].mxu0
        %2146 = vdwg.mxu0
        %2147 = vst [vmem:[%s595] sm:$0xff] %v2142
        %s2148 = sand.u32 %s445, 1
        %s2149 = scalar_lea.sflag [#allocation3], %s2148
        %s2150 = sand.u32 %s445, 1
        %s2151 = smul.addr %s2150, 8
        %s2152 = scalar_lea.vmem [#allocation2], %s2151
        // Predicated region
        $region97: #{simple_mlp_gelu.1} parent=95 // pred_check
          %p2153 = pneg %p455
        $region98: #{simple_mlp_gelu.1} parent=95 // pred_check_branch
          %2155 = sbr.rel (%p2153) target = $region100
        $region99: #{simple_mlp_gelu.1} parent=95 // pred_region
          %s2157 = ssub.s32 128, 128
          %2158 = vsyncadd %s2149, %s2157
          %s2159 = smul.addr %s33, 128
          %s2160 = scalar_lea.hbm %s19, %s2159
          %s2162 = sshll.u32 %s2152, 4
          %s2163 = int_to_ptr.vmem [resolvable:$true] %s2162
          %2165 = dma.vmem_to_hbm [thread:$0]  %s2163, 128, %s2160, %s2149
        $region100: #{simple_mlp_gelu.1} parent=95 // pred_fallthru
          _
      $region96: #{simple_mlp_gelu.1} parent=5 // pred_fallthru
        _
      %p2166 = scmp.le.s32.totalorder 2, %s28
      // Predicated region
      $region101: #{simple_mlp_gelu.1} parent=5 // pred_check
        %p2167 = pneg %p2166
      $region102: #{simple_mlp_gelu.1} parent=5 // pred_check_branch
        %2169 = sbr.rel (%p2167) target = $region104
      $region103: #{simple_mlp_gelu.1} parent=5 // pred_region
        %s2170 = ssub.s32 %s28, 2
        // Predicated region
        $region105: #{simple_mlp_gelu.1} parent=103 // pred_check
          %p2171 = pneg %p461
        $region106: #{simple_mlp_gelu.1} parent=103 // pred_check_branch
          %2173 = sbr.rel (%p2171) target = $region108
        $region107: #{simple_mlp_gelu.1} parent=103 // pred_region
          %s2174 = sand.u32 %s446, 1
          %s2175 = scalar_lea.sflag [#allocation3], %s2174
          %s2176 = sand.u32 %s446, 1
          %s2177 = smul.addr %s2176, 8
          %s2178 = scalar_lea.vmem [#allocation2], %s2177
          %2179 = dma.done %s2175, 128
        $region108: #{simple_mlp_gelu.1} parent=103 // pred_fallthru
          _
      $region104: #{simple_mlp_gelu.1} parent=5 // pred_fallthru
        _
    $region6: #{simple_mlp_gelu.1} parent=1 // loop_footer
      %s32 = sadd.s32 1, %s28
    $region7: #{simple_mlp_gelu.1} parent=1 // loop_footer_branch
      %27 = sbr.rel target = $region3
    $region8: #{simple_mlp_gelu.1} parent=1 // loop_exit
      _
    %2180 = vsyncpa [#allocation3], 1
    %s2181 = scalar_lea.sflag [#allocation3], 1
    %2182 = vsyncpa %s2181, 1

</llo_original>
